<compile_context>
chip_gen: v6e
topology: v6e:2x2x1
jax: 0.10.0
libtpu: 0.0.40
codegen_flags: <defaults>
</compile_context>

<pallas_src>
import jax
import jax.numpy as jnp
from jax.experimental import pallas as pl
from jax.experimental.pallas import tpu as pltpu


def _round_up(v, m):
    return ((v + m - 1) // m) * m


def _vmem_limit(est_bytes):
    # Explicit scoped-VMEM limit: above the 16/32 MiB defaults, safely below every
    # chip's physical VMEM (v7x = 64 MiB/TC).
    return int(min(max(2 * est_bytes, 32 * 1024 * 1024), 48 * 1024 * 1024))


# ----------------------------------------------------------------------------
# Conv3d (3x3x3, padding=1, stride=1) fused with bias + gate activations.
# One grid step per output timestep; kt lives in the matmul K dimension.
# ----------------------------------------------------------------------------
def _make_conv_kernel(Hc, Cp, M_out, W, act, chunk):
    Wp = W + 2  # padded width -> flat-row stride of an h-shift

    def conv_kernel(x0_ref, x1_ref, x2_ref, w_ref, b_ref, o_ref):
        w = w_ref[...]                                   # (2*Hc, 27*Cp) bf16, resident
        b = b_ref[...]                                   # (2*Hc, 1) f32
        slabs = (x0_ref[0], x1_ref[0], x2_ref[0])        # kt = 0,1,2, each (Cp, Sp) bf16

        for c0 in range(0, M_out, chunk):                # static chunking of lanes
            cw = min(chunk, M_out - c0)                  # always a multiple of 128
            pieces = []
            for slab in slabs:                           # kt major ...
                for dh in range(3):
                    for dw in range(3):                  # ... then (kh, kw), c fastest
                        off = dh * Wp + dw               # constant flat-row offset
                        pieces.append(slab[:, c0 + off:c0 + off + cw])
            x_cat = jnp.concatenate(pieces, axis=0)      # (27*Cp, cw) bf16, VMEM only

            # single MXU dot per (timestep, chunk), f32 accumulate, K = 27*Cp
            g = jnp.dot(w, x_cat, preferred_element_type=jnp.float32) + b

            zg = g[:Hc, :]
            fg = g[Hc:, :]
            if act == 'tanh':
                z = jnp.tanh(zg)
            elif act == 'relu':
                z = jnp.maximum(zg, 0.0)
            elif act == 'none':
                z = zg
            else:
                raise NotImplementedError(act)
            f = jax.nn.sigmoid(fg)
            # Store pre-multiplied z' = (1-f)*z so the serialized scan is one FMA.
            o_ref[0, :Hc, c0:c0 + cw] = ((1.0 - f) * z).astype(o_ref.dtype)
            o_ref[0, Hc:, c0:c0 + cw] = f.astype(o_ref.dtype)

    return conv_kernel


def conv3d_gates(x, weight, bias, hidden_channels, *, act='tanh'):
    """x: (N, Cin, T, H, W). weight: (2*Hc, Cin, 3, 3, 3). bias: (2*Hc,).
    Returns activated/premultiplied gates (T, 2*Hc, M_out) bf16:
      rows [0,Hc) = (1-sigmoid(F))*act(Z),  rows [Hc,2Hc) = sigmoid(F).
    Valid (n, h, w) lives at lane p = n*(H+2)*(W+2) + h*(W+2) + w; lanes >= Sn and
    the (h>=H or w>=W) ring are harmless garbage discarded by the wrapper."""
    N, Cin, T, H, W = x.shape
    Hc = hidden_channels
    Cout = 2 * Hc
    assert weight.shape == (Cout, Cin, 3, 3, 3)

    Cp = _round_up(Cin, 16)                   # whole packed bf16 (16,128) tiles per tap
    Sn = N * (H + 2) * (W + 2)                # flat padded-spatial rows per time step
    M_out = _round_up(Sn, 128)                # lane-dense output width
    halo = 2 * (W + 2) + 2                    # max in-slab tap offset
    Sp = M_out + _round_up(halo, 128)         # input slab width incl. lane-aligned halo
    chunk = min(M_out, 2048)                  # bounds x_cat / f32 temps for large M

    # --- glue (O(input) bytes; no im2col expansion) ---
    xp = jnp.pad(x, ((0, 0), (0, Cp - Cin), (1, 1), (1, 1), (1, 1)))
    xp = xp.transpose(2, 1, 0, 3, 4).reshape(T + 2, Cp, Sn)         # (T+2, Cp, Sn)
    xp = jnp.pad(xp, ((0, 0), (0, 0), (0, Sp - Sn))).astype(jnp.bfloat16)

    wpad = jnp.pad(weight, ((0, 0), (0, Cp - Cin), (0, 0), (0, 0), (0, 0)))
    # (Cout, Cp, kt, kh, kw) -> (Cout, kt, kh, kw, c) -> (Cout, 27*Cp); K order
    # matches the x_cat row order (kt, kh, kw, c).
    w3 = wpad.transpose(0, 2, 3, 4, 1).reshape(Cout, 27 * Cp).astype(jnp.bfloat16)
    b2 = bias.reshape(Cout, 1).astype(jnp.float32)

    est = (3 * 2 * Cp * Sp * 2            # 3 slab inputs, double-buffered, bf16
           + 2 * Cout * 27 * Cp * 2       # resident weight (headroom x2)
           + 2 * Cout * M_out * 2         # double-buffered bf16 output block
           + 27 * Cp * chunk * 2          # x_cat temp
           + 4 * Cout * chunk * 4)        # f32 dot/activation temps

    kernel = _make_conv_kernel(Hc, Cp, M_out, W, act, chunk)
    return pl.pallas_call(
        kernel,
        out_shape=jax.ShapeDtypeStruct((T, Cout, M_out), jnp.bfloat16),
        grid_spec=pltpu.PrefetchScalarGridSpec(
            num_scalar_prefetch=0,
            grid=(T,),
            in_specs=[
                pl.BlockSpec((1, Cp, Sp), lambda t: (t, 0, 0)),       # kt = 0
                pl.BlockSpec((1, Cp, Sp), lambda t: (t + 1, 0, 0)),   # kt = 1
                pl.BlockSpec((1, Cp, Sp), lambda t: (t + 2, 0, 0)),   # kt = 2
                pl.BlockSpec((Cout, 27 * Cp), lambda t: (0, 0)),      # weight: resident
                pl.BlockSpec((Cout, 1), lambda t: (0, 0)),            # bias: resident
            ],
            out_specs=pl.BlockSpec((1, Cout, M_out), lambda t: (t, 0, 0)),
        ),
        compiler_params=pltpu.CompilerParams(
            dimension_semantics=("parallel",),
            vmem_limit_bytes=_vmem_limit(est)),
    )(xp, xp, xp, w3, b2)


# ----------------------------------------------------------------------------
# QRNN recurrent scan over time: h_t = f_t * h_{t-1} + z'_t   (z' premultiplied)
# ----------------------------------------------------------------------------
def _make_scan_kernel(Hc):
    def scan_kernel(g_ref, h_ref, carry_ref):
        t = pl.program_id(1)
        zp = g_ref[0, :Hc, :].astype(jnp.float32)    # z' = (1-f)*z  (bf16 -> f32)
        f = g_ref[0, Hc:, :].astype(jnp.float32)

        @pl.when(t == 0)
        def _():
            carry_ref[...] = zp

        @pl.when(t > 0)
        def _():
            carry_ref[...] = f * carry_ref[...] + zp

        h_ref[0] = carry_ref[...].astype(h_ref.dtype)

    return scan_kernel


def _pick_m_tile(m_out, cap=4096):
    best = 128
    for cand in range(128, min(cap, m_out) + 1, 128):
        if m_out % cand == 0:
            best = cand
    return best


def qrnn_scan(gates, hidden_channels, *, reverse=False):
    """gates: (T, 2*Hc, M) bf16 (z' and f). Returns h_all (T, Hc, M) f32 in original
    time order (reverse only changes scan direction, like the PyTorch loop)."""
    T, C2, M = gates.shape
    Hc = hidden_channels
    assert C2 == 2 * Hc and M % 128 == 0
    TM = _pick_m_tile(M)                    # big lane tiles: the scan is overhead-bound
    n_m = M // TM

    def t_idx(t):
        return (T - 1 - t) if reverse else t

    g_spec = pl.BlockSpec((1, C2, TM), lambda m, t: (t_idx(t), 0, m))
    h_spec = pl.BlockSpec((1, Hc, TM), lambda m, t: (t_idx(t), 0, m))

    est = (2 * C2 * TM * 2      # double-buffered bf16 gate block
           + 2 * Hc * TM * 4    # double-buffered f32 output block
           + Hc * TM * 4        # carry scratch
           + 4 * Hc * TM * 4)   # f32 temps

    # NOTE: the carry reset at t == 0 relies on grid order (m outer "parallel",
    # t inner "arbitrary"); do not reorder the grid axes.
    return pl.pallas_call(
        _make_scan_kernel(Hc),
        out_shape=jax.ShapeDtypeStruct((T, Hc, M), jnp.float32),
        grid_spec=pltpu.PrefetchScalarGridSpec(
            num_scalar_prefetch=0,
            grid=(n_m, T),                                   # (pixel tiles, time)
            in_specs=[g_spec],
            out_specs=h_spec,
            scratch_shapes=[pltpu.VMEM((Hc, TM), jnp.float32)],
        ),
        compiler_params=pltpu.CompilerParams(
            dimension_semantics=("parallel", "arbitrary"),
            vmem_limit_bytes=_vmem_limit(est)),
    )(gates)


# ----------------------------------------------------------------------------
# Full QRNN3DLayer.forward
# ----------------------------------------------------------------------------
def qrnn3d_layer_forward(x, weight, bias, hidden_channels, *,
                         reverse=False, act='tanh'):
    """x: (N, Cin, T, H, W). Returns (h_last (N,Hc,H,W), h_all (N,Hc,T,H,W))."""
    N, Cin, T, H, W = x.shape
    Hc = hidden_channels

    gates = conv3d_gates(x, weight, bias, Hc, act=act)     # (T, 2*Hc, M_out) bf16
    h_pad = qrnn_scan(gates, Hc, reverse=reverse)          # (T, Hc, M_out) f32

    # extract the valid (n, h, w) region and go back to NCTHW (plain-XLA glue)
    Sn = N * (H + 2) * (W + 2)
    h_all = h_pad[:, :, :Sn].reshape(T, Hc, N, H + 2, W + 2)[:, :, :, :H, :W]
    h_all = h_all.transpose(2, 1, 0, 3, 4)                 # (N, Hc, T, H, W)
    last_t = 0 if reverse else T - 1
    h_last = h_all[:, :, last_t, :, :]
    return h_last, h_all


# ----------------------------------------------------------------------------
# Pure-JAX reference (correctness check only)
# ----------------------------------------------------------------------------
def _reference(x, weight, bias, hidden, reverse, act):
    gates = jax.lax.conv_general_dilated(
        x, weight, window_strides=(1, 1, 1), padding=[(1, 1)] * 3,
        dimension_numbers=('NCDHW', 'OIDHW', 'NCDHW'))
    gates = gates + bias.reshape(1, -1, 1, 1, 1)
    Zr = gates[:, :hidden]
    if act == 'tanh':
        Zr = jnp.tanh(Zr)
    elif act == 'relu':
        Zr = jnp.maximum(Zr, 0.0)
    Fr = jax.nn.sigmoid(gates[:, hidden:])
    T = x.shape[2]
    hs = [None] * T
    order = range(T - 1, -1, -1) if reverse else range(T)
    h = None
    for t in order:
        z = Zr[:, :, t]
        f = Fr[:, :, t]
        h = (1 - f) * z if h is None else f * h + (1 - f) * z
        hs[t] = h
    return h, jnp.stack(hs, axis=2)


if __name__ == "__main__":
    # Small shapes consistent with the module: N=2, Cin=4, T=8, H=W=16, Hc=32.
    N, Cin, T, H, W = 2, 4, 8, 16, 16
    hidden = 32

    key = jax.random.PRNGKey(0)
    kx, kw, kb = jax.random.split(key, 3)
    x = jax.random.normal(kx, (N, Cin, T, H, W), dtype=jnp.float32)
    weight = 0.1 * jax.random.normal(kw, (2 * hidden, Cin, 3, 3, 3), dtype=jnp.float32)
    bias = 0.01 * jax.random.normal(kb, (2 * hidden,), dtype=jnp.float32)

    h_last, h_all = qrnn3d_layer_forward(x, weight, bias, hidden,
                                         reverse=False, act='tanh')
    jax.block_until_ready(h_all)

    ref_last, ref_all = _reference(x, weight, bias, hidden, reverse=False, act='tanh')
    assert h_last.shape == (N, hidden, H, W)
    assert h_all.shape == (N, hidden, T, H, W)
    # bf16 MXU operands + bf16 gate storage (f32 carry) -> looser tolerance than f32.
    assert jnp.allclose(h_last, ref_last, atol=4e-2, rtol=4e-2)
    assert jnp.allclose(h_all, ref_all, atol=4e-2, rtol=4e-2)

    # Also exercise the reverse scan path once.
    h_last_r, h_all_r = qrnn3d_layer_forward(x, weight, bias, hidden,
                                             reverse=True, act='tanh')
    jax.block_until_ready(h_all_r)
    ref_last_r, ref_all_r = _reference(x, weight, bias, hidden, reverse=True, act='tanh')
    assert jnp.allclose(h_last_r, ref_last_r, atol=4e-2, rtol=4e-2)
    assert jnp.allclose(h_all_r, ref_all_r, atol=4e-2, rtol=4e-2)

    print("KERNEL_OK")
</pallas_src>

<mosaic_0001>
module attributes {stable_mosaic.version = 11 : i64} {
  func.func @conv_kernel(%arg0: i32, %arg1: memref<1x16x896xbf16, #tpu.memory_space<vmem>>, %arg2: memref<1x16x896xbf16, #tpu.memory_space<vmem>>, %arg3: memref<1x16x896xbf16, #tpu.memory_space<vmem>>, %arg4: memref<64x432xbf16, #tpu.memory_space<vmem>>, %arg5: memref<64x1xf32, #tpu.memory_space<vmem>>, %arg6: memref<1x64x768xbf16, #tpu.memory_space<vmem>>) attributes {dimension_semantics = [#tpu.dimension_semantics<parallel>], iteration_bounds = array<i64: 8>, scalar_prefetch = 0 : i64, scratch_operands = 0 : i64, tpu.core_type = #tpu.core_type<tc>, window_params = [{transform_indices = @transform_0, window_bounds = array<i64: 1, 16, 896>}, {transform_indices = @transform_1, window_bounds = array<i64: 1, 16, 896>}, {transform_indices = @transform_2, window_bounds = array<i64: 1, 16, 896>}, {pipeline_mode = #tpu.pipeline_mode<synchronous>, transform_indices = @transform_3, window_bounds = array<i64: 64, 432>}, {pipeline_mode = #tpu.pipeline_mode<synchronous>, transform_indices = @transform_4, window_bounds = array<i64: 64, 1>}, {transform_indices = @transform_5, window_bounds = array<i64: 1, 64, 768>}]} {
    %c0 = arith.constant 0 : index
    %c0_0 = arith.constant 0 : index
    %0 = vector.load %arg4[%c0, %c0_0] : memref<64x432xbf16, #tpu.memory_space<vmem>>, vector<64x432xbf16>
    %c0_1 = arith.constant 0 : index
    %c0_2 = arith.constant 0 : index
    %1 = vector.load %arg5[%c0_1, %c0_2] : memref<64x1xf32, #tpu.memory_space<vmem>>, vector<64x1xf32>
    %c0_3 = arith.constant 0 : index
    %c0_4 = arith.constant 0 : index
    %c0_5 = arith.constant 0 : index
    %2 = vector.load %arg1[%c0_3, %c0_4, %c0_5] : memref<1x16x896xbf16, #tpu.memory_space<vmem>>, vector<1x16x896xbf16>
    %3 = vector.shape_cast %2 : vector<1x16x896xbf16> to vector<16x896xbf16>
    %c0_6 = arith.constant 0 : index
    %c0_7 = arith.constant 0 : index
    %c0_8 = arith.constant 0 : index
    %4 = vector.load %arg2[%c0_6, %c0_7, %c0_8] : memref<1x16x896xbf16, #tpu.memory_space<vmem>>, vector<1x16x896xbf16>
    %5 = vector.shape_cast %4 : vector<1x16x896xbf16> to vector<16x896xbf16>
    %c0_9 = arith.constant 0 : index
    %c0_10 = arith.constant 0 : index
    %c0_11 = arith.constant 0 : index
    %6 = vector.load %arg3[%c0_9, %c0_10, %c0_11] : memref<1x16x896xbf16, #tpu.memory_space<vmem>>, vector<1x16x896xbf16>
    %7 = vector.shape_cast %6 : vector<1x16x896xbf16> to vector<16x896xbf16>
    %8 = vector.extract_strided_slice %3 {offsets = [0, 0], sizes = [16, 768], strides = [1, 1]} : vector<16x896xbf16> to vector<16x768xbf16>
    %9 = vector.extract_strided_slice %3 {offsets = [0, 1], sizes = [16, 768], strides = [1, 1]} : vector<16x896xbf16> to vector<16x768xbf16>
    %10 = vector.extract_strided_slice %3 {offsets = [0, 2], sizes = [16, 768], strides = [1, 1]} : vector<16x896xbf16> to vector<16x768xbf16>
    %11 = vector.extract_strided_slice %3 {offsets = [0, 18], sizes = [16, 768], strides = [1, 1]} : vector<16x896xbf16> to vector<16x768xbf16>
    %12 = vector.extract_strided_slice %3 {offsets = [0, 19], sizes = [16, 768], strides = [1, 1]} : vector<16x896xbf16> to vector<16x768xbf16>
    %13 = vector.extract_strided_slice %3 {offsets = [0, 20], sizes = [16, 768], strides = [1, 1]} : vector<16x896xbf16> to vector<16x768xbf16>
    %14 = vector.extract_strided_slice %3 {offsets = [0, 36], sizes = [16, 768], strides = [1, 1]} : vector<16x896xbf16> to vector<16x768xbf16>
    %15 = vector.extract_strided_slice %3 {offsets = [0, 37], sizes = [16, 768], strides = [1, 1]} : vector<16x896xbf16> to vector<16x768xbf16>
    %16 = vector.extract_strided_slice %3 {offsets = [0, 38], sizes = [16, 768], strides = [1, 1]} : vector<16x896xbf16> to vector<16x768xbf16>
    %17 = vector.extract_strided_slice %5 {offsets = [0, 0], sizes = [16, 768], strides = [1, 1]} : vector<16x896xbf16> to vector<16x768xbf16>
    %18 = vector.extract_strided_slice %5 {offsets = [0, 1], sizes = [16, 768], strides = [1, 1]} : vector<16x896xbf16> to vector<16x768xbf16>
    %19 = vector.extract_strided_slice %5 {offsets = [0, 2], sizes = [16, 768], strides = [1, 1]} : vector<16x896xbf16> to vector<16x768xbf16>
    %20 = vector.extract_strided_slice %5 {offsets = [0, 18], sizes = [16, 768], strides = [1, 1]} : vector<16x896xbf16> to vector<16x768xbf16>
    %21 = vector.extract_strided_slice %5 {offsets = [0, 19], sizes = [16, 768], strides = [1, 1]} : vector<16x896xbf16> to vector<16x768xbf16>
    %22 = vector.extract_strided_slice %5 {offsets = [0, 20], sizes = [16, 768], strides = [1, 1]} : vector<16x896xbf16> to vector<16x768xbf16>
    %23 = vector.extract_strided_slice %5 {offsets = [0, 36], sizes = [16, 768], strides = [1, 1]} : vector<16x896xbf16> to vector<16x768xbf16>
    %24 = vector.extract_strided_slice %5 {offsets = [0, 37], sizes = [16, 768], strides = [1, 1]} : vector<16x896xbf16> to vector<16x768xbf16>
    %25 = vector.extract_strided_slice %5 {offsets = [0, 38], sizes = [16, 768], strides = [1, 1]} : vector<16x896xbf16> to vector<16x768xbf16>
    %26 = vector.extract_strided_slice %7 {offsets = [0, 0], sizes = [16, 768], strides = [1, 1]} : vector<16x896xbf16> to vector<16x768xbf16>
    %27 = vector.extract_strided_slice %7 {offsets = [0, 1], sizes = [16, 768], strides = [1, 1]} : vector<16x896xbf16> to vector<16x768xbf16>
    %28 = vector.extract_strided_slice %7 {offsets = [0, 2], sizes = [16, 768], strides = [1, 1]} : vector<16x896xbf16> to vector<16x768xbf16>
    %29 = vector.extract_strided_slice %7 {offsets = [0, 18], sizes = [16, 768], strides = [1, 1]} : vector<16x896xbf16> to vector<16x768xbf16>
    %30 = vector.extract_strided_slice %7 {offsets = [0, 19], sizes = [16, 768], strides = [1, 1]} : vector<16x896xbf16> to vector<16x768xbf16>
    %31 = vector.extract_strided_slice %7 {offsets = [0, 20], sizes = [16, 768], strides = [1, 1]} : vector<16x896xbf16> to vector<16x768xbf16>
    %32 = vector.extract_strided_slice %7 {offsets = [0, 36], sizes = [16, 768], strides = [1, 1]} : vector<16x896xbf16> to vector<16x768xbf16>
    %33 = vector.extract_strided_slice %7 {offsets = [0, 37], sizes = [16, 768], strides = [1, 1]} : vector<16x896xbf16> to vector<16x768xbf16>
    %34 = vector.extract_strided_slice %7 {offsets = [0, 38], sizes = [16, 768], strides = [1, 1]} : vector<16x896xbf16> to vector<16x768xbf16>
    %35 = tpu.concatenate %8, %9, %10, %11, %12, %13, %14, %15, %16, %17, %18, %19, %20, %21, %22, %23 in 0 : vector<16x768xbf16>, vector<16x768xbf16>, vector<16x768xbf16>, vector<16x768xbf16>, vector<16x768xbf16>, vector<16x768xbf16>, vector<16x768xbf16>, vector<16x768xbf16>, vector<16x768xbf16>, vector<16x768xbf16>, vector<16x768xbf16>, vector<16x768xbf16>, vector<16x768xbf16>, vector<16x768xbf16>, vector<16x768xbf16>, vector<16x768xbf16> -> vector<256x768xbf16>
    %36 = tpu.concatenate %24, %25, %26, %27, %28, %29, %30, %31, %32, %33, %34 in 0 : vector<16x768xbf16>, vector<16x768xbf16>, vector<16x768xbf16>, vector<16x768xbf16>, vector<16x768xbf16>, vector<16x768xbf16>, vector<16x768xbf16>, vector<16x768xbf16>, vector<16x768xbf16>, vector<16x768xbf16>, vector<16x768xbf16> -> vector<176x768xbf16>
    %37 = tpu.concatenate %35, %36 in 0 : vector<256x768xbf16>, vector<176x768xbf16> -> vector<432x768xbf16>
    %cst = arith.constant dense<0.000000e+00> : vector<64x768xf32>
    %38 = tpu.matmul %0, %37, %cst {dimension_numbers = #tpu.dot_dimension_numbers<[1], [0], [0], [1], [0, 0, 1, 1], [], []>} : vector<64x432xbf16>, vector<432x768xbf16>, vector<64x768xf32> -> vector<64x768xf32>
    %39 = vector.broadcast %1 : vector<64x1xf32> to vector<64x768xf32>
    %40 = arith.addf %38, %39 : vector<64x768xf32>
    %41 = vector.extract_strided_slice %40 {offsets = [0, 0], sizes = [32, 768], strides = [1, 1]} : vector<64x768xf32> to vector<32x768xf32>
    %42 = vector.extract_strided_slice %40 {offsets = [32, 0], sizes = [32, 768], strides = [1, 1]} : vector<64x768xf32> to vector<32x768xf32>
    %43 = math.tanh %41 : vector<32x768xf32>
    %44 = arith.negf %42 : vector<32x768xf32>
    %45 = math.exp %44 : vector<32x768xf32>
    %cst_12 = arith.constant 1.000000e+00 : f32
    %46 = vector.broadcast %cst_12 : f32 to vector<32x768xf32>
    %47 = arith.addf %46, %45 : vector<32x768xf32>
    %48 = arith.divf %46, %47 : vector<32x768xf32>
    %cst_13 = arith.constant 1.000000e+00 : f32
    %49 = vector.broadcast %cst_13 : f32 to vector<32x768xf32>
    %50 = arith.subf %49, %48 : vector<32x768xf32>
    %51 = arith.mulf %50, %43 : vector<32x768xf32>
    %52 = arith.truncf %51 : vector<32x768xf32> to vector<32x768xbf16>
    %c0_14 = arith.constant 0 : index
    %c0_15 = arith.constant 0 : index
    %c0_16 = arith.constant 0 : index
    %53 = vector.load %arg6[%c0_14, %c0_15, %c0_16] : memref<1x64x768xbf16, #tpu.memory_space<vmem>>, vector<1x32x768xbf16>
    %54 = vector.shape_cast %53 : vector<1x32x768xbf16> to vector<32x768xbf16>
    %55 = vector.shape_cast %52 : vector<32x768xbf16> to vector<1x32x768xbf16>
    tpu.vector_store %arg6[%c0_14, %c0_15, %c0_16], %55 {strides = array<i32>} : memref<1x64x768xbf16, #tpu.memory_space<vmem>>, vector<1x32x768xbf16>,
    %56 = arith.truncf %48 : vector<32x768xf32> to vector<32x768xbf16>
    %c0_17 = arith.constant 0 : index
    %c32 = arith.constant 32 : index
    %c0_18 = arith.constant 0 : index
    %57 = vector.load %arg6[%c0_17, %c32, %c0_18] : memref<1x64x768xbf16, #tpu.memory_space<vmem>>, vector<1x32x768xbf16>
    %58 = vector.shape_cast %57 : vector<1x32x768xbf16> to vector<32x768xbf16>
    %59 = vector.shape_cast %56 : vector<32x768xbf16> to vector<1x32x768xbf16>
    tpu.vector_store %arg6[%c0_17, %c32, %c0_18], %59 {strides = array<i32>} : memref<1x64x768xbf16, #tpu.memory_space<vmem>>, vector<1x32x768xbf16>,
    return
  }
  func.func @transform_0(%arg0: i32) -> (i32, i32, i32) {
    %c0_i32 = arith.constant 0 : i32
    %c0_i32_0 = arith.constant 0 : i32
    %c0_i32_1 = arith.constant 0 : i32
    return %arg0, %c0_i32, %c0_i32_0 : i32, i32, i32
  }
  func.func @transform_1(%arg0: i32) -> (i32, i32, i32) {
    %c1_i32 = arith.constant 1 : i32
    %0 = arith.addi %arg0, %c1_i32 : i32
    %c0_i32 = arith.constant 0 : i32
    %c0_i32_0 = arith.constant 0 : i32
    %c0_i32_1 = arith.constant 0 : i32
    return %0, %c0_i32, %c0_i32_0 : i32, i32, i32
  }
  func.func @transform_2(%arg0: i32) -> (i32, i32, i32) {
    %c2_i32 = arith.constant 2 : i32
    %0 = arith.addi %arg0, %c2_i32 : i32
    %c0_i32 = arith.constant 0 : i32
    %c0_i32_0 = arith.constant 0 : i32
    %c0_i32_1 = arith.constant 0 : i32
    return %0, %c0_i32, %c0_i32_0 : i32, i32, i32
  }
  func.func @transform_3(%arg0: i32) -> (i32, i32) {
    %c0_i32 = arith.constant 0 : i32
    %c0_i32_0 = arith.constant 0 : i32
    %c0_i32_1 = arith.constant 0 : i32
    return %c0_i32, %c0_i32_0 : i32, i32
  }
  func.func @transform_4(%arg0: i32) -> (i32, i32) {
    %c0_i32 = arith.constant 0 : i32
    %c0_i32_0 = arith.constant 0 : i32
    %c0_i32_1 = arith.constant 0 : i32
    return %c0_i32, %c0_i32_0 : i32, i32
  }
  func.func @transform_5(%arg0: i32) -> (i32, i32, i32) {
    %c0_i32 = arith.constant 0 : i32
    %c0_i32_0 = arith.constant 0 : i32
    %c0_i32_1 = arith.constant 0 : i32
    return %arg0, %c0_i32, %c0_i32_0 : i32, i32, i32
  }
}

</mosaic_0001>

<llo_original>
// kernel: tpu_custom_call.1
$region0: #{tpu_custom_call.1}
  #allocation0 [shape = 'u32[]', space=smem, size = 0x4, offset = 0x4, fixed_abs, tag = 'smem constant byte address 0x4 - core index']
  #allocation1 [shape = 'u32[144,128]{1,0:T(1,128)}', space=vmem, size = 0x12000, scoped, tag = 'internal scratch']
  %s0 = inlined_call_operand.hbm [shape: bf16[10,16,896], index: 0, kind: input, shape index: {}]
  %s1 = inlined_call_operand.hbm [shape: bf16[10,16,896], index: 1, kind: input, shape index: {}]
  %s2 = inlined_call_operand.hbm [shape: bf16[10,16,896], index: 2, kind: input, shape index: {}]
  %s3 = inlined_call_operand.hbm [shape: bf16[64,432], index: 3, kind: input, shape index: {}]
  %s4 = inlined_call_operand.vmem [shape: f32[64,1], index: 4, kind: input, shape index: {}]
  %s5 = inlined_call_operand.hbm [shape: bf16[8,64,768], index: 5, kind: output, shape index: {}]
  %s6 = sld [smem:[#allocation0]]
  $region69: #{tpu_custom_call.1} parent=0
    _
  %s8 = ssub.s32 1, %s6
  %s9 = scalar_select 0, %s8, %s6
  $region1: #{tpu_custom_call.1} parent=0
    #allocation2 [shape = 'u8[57344]{0}', space=vmem, size = 0xe000, scoped, tag = 'input window, operand 0']
    #allocation3 [shape = 's32[2]{0}', space=sflag, size = 0x8, scoped, tag = 'scoped memory for tpu_custom_call.1']
    #allocation4 [shape = 's32[2]{0}', space=sflag, size = 0x8, scoped, tag = 'scoped memory for tpu_custom_call.1']
    #allocation5 [shape = 'u8[57344]{0}', space=vmem, size = 0xe000, scoped, tag = 'input window, operand 1']
    #allocation6 [shape = 's32[2]{0}', space=sflag, size = 0x8, scoped, tag = 'scoped memory for tpu_custom_call.1']
    #allocation7 [shape = 'u8[57344]{0}', space=vmem, size = 0xe000, scoped, tag = 'input window, operand 2']
    #allocation8 [shape = 'u8[65536]{0}', space=vmem, size = 0x10000, scoped, tag = 'input window, operand 3, single buffered']
    #allocation9 [shape = 's32[1]{0}', space=sflag, size = 0x4, scoped, tag = 'scoped memory for tpu_custom_call.1']
    #allocation10 [shape = 'u8[196608]{0}', space=vmem, size = 0x30000, scoped, tag = 'output window, operand 0']
    %10 = vsyncpa [#allocation3], 0
    %s11 = scalar_lea.sflag [#allocation3], 1
    %12 = vsyncpa %s11, 0
    %13 = vsyncpa [#allocation6], 0
    %s14 = scalar_lea.sflag [#allocation6], 1
    %15 = vsyncpa %s14, 0
    %16 = vsyncpa [#allocation9], 0
    %17 = vsyncpa [#allocation4], 0
    %s18 = scalar_lea.sflag [#allocation4], 1
    %19 = vsyncpa %s18, 0
    loop: start=0, step=1, limit=10
    $region2: #{tpu_custom_call.1} parent=1 // loop_pre_header
      _
    $region3: #{tpu_custom_call.1} parent=1 // loop_header
      %s21 = sphi 0, %s25
      %p22 = scmp.ge.s32.totalorder %s21, 10
      %s31 = sphi 0, %s33
      %s34 = sphi 0, %s31
      %s35 = sphi 0, %s34
      %s51 = sphi 0, %s35
      %s59 = sphi 0, %s61
      %s62 = sphi 0, %s59
      %s63 = sphi 0, %s62
      %s79 = sphi 0, %s63
      %s87 = sphi 0, %s89
      %s90 = sphi 0, %s87
      %s91 = sphi 0, %s90
      %s107 = sphi 0, %s91
      %s111 = sphi 0, %s111
      %s113 = sphi 0, %s111
      %s114 = sphi 0, %s113
      %s128 = sphi 0, %s114
      %s132 = sphi 0, %s132
      %s134 = sphi 0, %s132
      %s135 = sphi 0, %s134
      %s149 = sphi 0, %s135
      %s155 = sphi 0, %s157
      %s158 = sphi 0, %s155
      %s159 = sphi 0, %s158
      %s175 = sphi 0, %s159
    $region4: #{tpu_custom_call.1} parent=1 // loop_header_branch
      %24 = sbr.rel (%p22) target = $region8
    $region5: #{tpu_custom_call.1} parent=1 // loop_body
      %s26 = ssub.s32 %s21, 1
      %s27 = ssub.s32 %s21, 2
      %s28 = sadd.s32 %s21, 1
      %s29 = ssub.s32 %s21, %s28
      %p30 = scmp.eq.s32.totalorder %s29, 0
      %s32 = sadd.s32 %s31, 1
      %s33 = scalar_select %p30, %s31, %s32
      %p36 = pneg %p30
      %p37 = scmp.eq.s32.totalorder %s21, 7
      %p38 = por %p36, %p37
      %p39 = scmp.ne.s32.totalorder %s31, %s34
      %p40 = scmp.eq.s32.totalorder %s21, 0
      %p41 = por %p39, %p40
      %p42 = scmp.ne.s32.totalorder %s31, %s34
      %p43 = scmp.eq.s32.totalorder %s26, 7
      %p44 = por %p42, %p43
      %p45 = scmp.ne.s32.totalorder %s34, %s35
      %p46 = scmp.eq.s32.totalorder %s26, 0
      %p47 = por %p45, %p46
      %p48 = scmp.ne.s32.totalorder %s34, %s35
      %p49 = scmp.eq.s32.totalorder %s27, 7
      %p50 = por %p48, %p49
      %p52 = scmp.ne.s32.totalorder %s35, %s51
      %p53 = scmp.eq.s32.totalorder %s27, 0
      %p54 = por %p52, %p53
      %s55 = sadd.s32 %s21, 1
      %s56 = sadd.s32 %s28, 1
      %s57 = ssub.s32 %s55, %s56
      %p58 = scmp.eq.s32.totalorder %s57, 0
      %s60 = sadd.s32 %s59, 1
      %s61 = scalar_select %p58, %s59, %s60
      %p64 = pneg %p58
      %p65 = scmp.eq.s32.totalorder %s21, 7
      %p66 = por %p64, %p65
      %p67 = scmp.ne.s32.totalorder %s59, %s62
      %p68 = scmp.eq.s32.totalorder %s21, 0
      %p69 = por %p67, %p68
      %p70 = scmp.ne.s32.totalorder %s59, %s62
      %p71 = scmp.eq.s32.totalorder %s26, 7
      %p72 = por %p70, %p71
      %p73 = scmp.ne.s32.totalorder %s62, %s63
      %p74 = scmp.eq.s32.totalorder %s26, 0
      %p75 = por %p73, %p74
      %p76 = scmp.ne.s32.totalorder %s62, %s63
      %p77 = scmp.eq.s32.totalorder %s27, 7
      %p78 = por %p76, %p77
      %p80 = scmp.ne.s32.totalorder %s63, %s79
      %p81 = scmp.eq.s32.totalorder %s27, 0
      %p82 = por %p80, %p81
      %s83 = sadd.s32 %s21, 2
      %s84 = sadd.s32 %s28, 2
      %s85 = ssub.s32 %s83, %s84
      %p86 = scmp.eq.s32.totalorder %s85, 0
      %s88 = sadd.s32 %s87, 1
      %s89 = scalar_select %p86, %s87, %s88
      %p92 = pneg %p86
      %p93 = scmp.eq.s32.totalorder %s21, 7
      %p94 = por %p92, %p93
      %p95 = scmp.ne.s32.totalorder %s87, %s90
      %p96 = scmp.eq.s32.totalorder %s21, 0
      %p97 = por %p95, %p96
      %p98 = scmp.ne.s32.totalorder %s87, %s90
      %p99 = scmp.eq.s32.totalorder %s26, 7
      %p100 = por %p98, %p99
      %p101 = scmp.ne.s32.totalorder %s90, %s91
      %p102 = scmp.eq.s32.totalorder %s26, 0
      %p103 = por %p101, %p102
      %p104 = scmp.ne.s32.totalorder %s90, %s91
      %p105 = scmp.eq.s32.totalorder %s27, 7
      %p106 = por %p104, %p105
      %p108 = scmp.ne.s32.totalorder %s91, %s107
      %p109 = scmp.eq.s32.totalorder %s27, 0
      %p110 = por %p108, %p109
      %s112 = sadd.s32 %s111, 1
      %p115 = scmp.eq.s32.totalorder %s21, 7
      %p116 = scmp.ne.s32.totalorder %s111, %s113
      %p117 = scmp.eq.s32.totalorder %s21, 0
      %p118 = por %p116, %p117
      %p119 = scmp.ne.s32.totalorder %s111, %s113
      %p120 = scmp.eq.s32.totalorder %s26, 7
      %p121 = por %p119, %p120
      %p122 = scmp.ne.s32.totalorder %s113, %s114
      %p123 = scmp.eq.s32.totalorder %s26, 0
      %p124 = por %p122, %p123
      %p125 = scmp.ne.s32.totalorder %s113, %s114
      %p126 = scmp.eq.s32.totalorder %s27, 7
      %p127 = por %p125, %p126
      %p129 = scmp.ne.s32.totalorder %s114, %s128
      %p130 = scmp.eq.s32.totalorder %s27, 0
      %p131 = por %p129, %p130
      %s133 = sadd.s32 %s132, 1
      %p136 = scmp.eq.s32.totalorder %s21, 7
      %p137 = scmp.ne.s32.totalorder %s132, %s134
      %p138 = scmp.eq.s32.totalorder %s21, 0
      %p139 = por %p137, %p138
      %p140 = scmp.ne.s32.totalorder %s132, %s134
      %p141 = scmp.eq.s32.totalorder %s26, 7
      %p142 = por %p140, %p141
      %p143 = scmp.ne.s32.totalorder %s134, %s135
      %p144 = scmp.eq.s32.totalorder %s26, 0
      %p145 = por %p143, %p144
      %p146 = scmp.ne.s32.totalorder %s134, %s135
      %p147 = scmp.eq.s32.totalorder %s27, 7
      %p148 = por %p146, %p147
      %p150 = scmp.ne.s32.totalorder %s135, %s149
      %p151 = scmp.eq.s32.totalorder %s27, 0
      %p152 = por %p150, %p151
      %s153 = ssub.s32 %s21, %s28
      %p154 = scmp.eq.s32.totalorder %s153, 0
      %s156 = sadd.s32 %s155, 1
      %s157 = scalar_select %p154, %s155, %s156
      %p160 = pneg %p154
      %p161 = scmp.eq.s32.totalorder %s21, 7
      %p162 = por %p160, %p161
      %p163 = scmp.ne.s32.totalorder %s155, %s158
      %p164 = scmp.eq.s32.totalorder %s21, 0
      %p165 = por %p163, %p164
      %p166 = scmp.ne.s32.totalorder %s155, %s158
      %p167 = scmp.eq.s32.totalorder %s26, 7
      %p168 = por %p166, %p167
      %p169 = scmp.ne.s32.totalorder %s158, %s159
      %p170 = scmp.eq.s32.totalorder %s26, 0
      %p171 = por %p169, %p170
      %p172 = scmp.ne.s32.totalorder %s158, %s159
      %p173 = scmp.eq.s32.totalorder %s27, 7
      %p174 = por %p172, %p173
      %p176 = scmp.ne.s32.totalorder %s159, %s175
      %p177 = scmp.eq.s32.totalorder %s27, 0
      %p178 = por %p176, %p177
      %p179 = scmp.le.s32.totalorder 1, %s21
      %p180 = scmp.lt.s32.totalorder %s21, 9
      %p181 = pnand %p179, %p180
      %p182 = pneg %p181
      // Predicated region
      $region9: #{tpu_custom_call.1} parent=5 // pred_check
        _
      $region10: #{tpu_custom_call.1} parent=5 // pred_check_branch
        %184 = sbr.rel (%p181) target = $region12
      $region11: #{tpu_custom_call.1} parent=5 // pred_region
        %s185 = ssub.s32 %s21, 1
        // Predicated region
        $region13: #{tpu_custom_call.1} parent=11 // pred_check
          %p186 = pneg %p124
        $region14: #{tpu_custom_call.1} parent=11 // pred_check_branch
          %188 = sbr.rel (%p186) target = $region16
        $region15: #{tpu_custom_call.1} parent=11 // pred_region
          %s190 = ssub.s32 2048, 2048
          %191 = vsyncadd [#allocation9], %s190
          %s192 = sshll.u32 [#allocation8], 4
          %s193 = int_to_ptr.vmem [resolvable:$true] %s192
          %198 = dma.hbm_to_vmem [thread:$0]  %s3, 2048, %s193, [#allocation9], 256, 256, 16
        $region16: #{tpu_custom_call.1} parent=11 // pred_fallthru
          _
        // Predicated region
        $region17: #{tpu_custom_call.1} parent=11 // pred_check
          %p199 = pneg %p145
        $region18: #{tpu_custom_call.1} parent=11 // pred_check_branch
          %201 = sbr.rel (%p199) target = $region20
        $region19: #{tpu_custom_call.1} parent=11 // pred_region
          _
        $region20: #{tpu_custom_call.1} parent=11 // pred_fallthru
          _
      $region12: #{tpu_custom_call.1} parent=5 // pred_fallthru
        _
      %p202 = scmp.lt.s32.totalorder %s21, 8
      // Predicated region
      $region21: #{tpu_custom_call.1} parent=5 // pred_check
        %p203 = pneg %p202
      $region22: #{tpu_custom_call.1} parent=5 // pred_check_branch
        %205 = sbr.rel (%p203) target = $region24
      $region23: #{tpu_custom_call.1} parent=5 // pred_region
        // Predicated region
        $region25: #{tpu_custom_call.1} parent=23 // pred_check
          %p206 = pneg %p41
        $region26: #{tpu_custom_call.1} parent=23 // pred_check_branch
          %208 = sbr.rel (%p206) target = $region28
        $region27: #{tpu_custom_call.1} parent=23 // pred_region
          %s209 = sand.u32 %s31, 1
          %s210 = scalar_lea.sflag [#allocation3], %s209
          %s211 = sand.u32 %s31, 1
          %s212 = smul.addr %s211, 56
          %s213 = scalar_lea.vmem [#allocation2], %s212
          %s215 = ssub.s32 896, 896
          %216 = vsyncadd %s210, %s215
          %s217 = smul.addr %s21, 14
          %s218 = smul.addr %s217, 64
          %s219 = scalar_lea.hbm %s0, %s218
          %s220 = sshll.u32 %s213, 4
          %s221 = int_to_ptr.vmem [resolvable:$true] %s220
          %226 = dma.hbm_to_vmem [thread:$0]  %s219, 896, %s221, %s210, 448, 448, 28
        $region28: #{tpu_custom_call.1} parent=23 // pred_fallthru
          _
        // Predicated region
        $region29: #{tpu_custom_call.1} parent=23 // pred_check
          %p227 = pneg %p69
        $region30: #{tpu_custom_call.1} parent=23 // pred_check_branch
          %229 = sbr.rel (%p227) target = $region32
        $region31: #{tpu_custom_call.1} parent=23 // pred_region
          %s230 = sand.u32 %s21, 1
          %s231 = scalar_lea.sflag [#allocation6], %s230
          %s232 = sand.u32 %s59, 1
          %s233 = smul.addr %s232, 56
          %s234 = scalar_lea.vmem [#allocation5], %s233
          %s235 = sadd.s32 %s21, 1
          %s237 = ssub.s32 896, 896
          %238 = vsyncadd %s231, %s237
          %s239 = smul.addr %s235, 14
          %s240 = smul.addr %s239, 64
          %s241 = scalar_lea.hbm %s1, %s240
          %s242 = sshll.u32 %s234, 4
          %s243 = int_to_ptr.vmem [resolvable:$true] %s242
          %248 = dma.hbm_to_vmem [thread:$0]  %s241, 896, %s243, %s231, 448, 448, 28
        $region32: #{tpu_custom_call.1} parent=23 // pred_fallthru
          _
        // Predicated region
        $region33: #{tpu_custom_call.1} parent=23 // pred_check
          %p249 = pneg %p97
        $region34: #{tpu_custom_call.1} parent=23 // pred_check_branch
          %251 = sbr.rel (%p249) target = $region36
        $region35: #{tpu_custom_call.1} parent=23 // pred_region
          %s252 = sand.u32 %s21, 1
          %s253 = scalar_lea.sflag [#allocation6], %s252
          %s254 = sand.u32 %s87, 1
          %s255 = smul.addr %s254, 56
          %s256 = scalar_lea.vmem [#allocation7], %s255
          %s257 = sadd.s32 %s21, 2
          %s259 = ssub.s32 896, 896
          %260 = vsyncadd %s253, %s259
          %s261 = smul.addr %s257, 14
          %s262 = smul.addr %s261, 64
          %s263 = scalar_lea.hbm %s2, %s262
          %s264 = sshll.u32 %s256, 4
          %s265 = int_to_ptr.vmem [resolvable:$true] %s264
          %270 = dma.hbm_to_vmem [thread:$0]  %s263, 896, %s265, %s253, 448, 448, 28
        $region36: #{tpu_custom_call.1} parent=23 // pred_fallthru
          _
      $region24: #{tpu_custom_call.1} parent=5 // pred_fallthru
        _
      %p271 = scmp.le.s32.totalorder 1, %s21
      %p272 = scmp.lt.s32.totalorder %s21, 9
      %p273 = pnand %p271, %p272
      %p274 = pneg %p273
      // Predicated region
      $region37: #{tpu_custom_call.1} parent=5 // pred_check
        _
      $region38: #{tpu_custom_call.1} parent=5 // pred_check_branch
        %276 = sbr.rel (%p273) target = $region40
      $region39: #{tpu_custom_call.1} parent=5 // pred_region
        %s277 = ssub.s32 %s21, 1
        %s278 = sand.u32 %s34, 1
        %s279 = scalar_lea.sflag [#allocation3], %s278
        %s280 = sand.u32 %s34, 1
        %s281 = smul.addr %s280, 56
        %s282 = scalar_lea.vmem [#allocation2], %s281
        // Predicated region
        $region41: #{tpu_custom_call.1} parent=39 // pred_check
          %p283 = pneg %p47
        $region42: #{tpu_custom_call.1} parent=39 // pred_check_branch
          %285 = sbr.rel (%p283) target = $region44
        $region43: #{tpu_custom_call.1} parent=39 // pred_region
          %286 = dma.done %s279, 896
        $region44: #{tpu_custom_call.1} parent=39 // pred_fallthru
          _
        %s287 = sand.u32 %s26, 1
        %s288 = scalar_lea.sflag [#allocation6], %s287
        %s289 = sand.u32 %s62, 1
        %s290 = smul.addr %s289, 56
        %s291 = scalar_lea.vmem [#allocation5], %s290
        // Predicated region
        $region45: #{tpu_custom_call.1} parent=39 // pred_check
          %p292 = pneg %p75
        $region46: #{tpu_custom_call.1} parent=39 // pred_check_branch
          %294 = sbr.rel (%p292) target = $region48
        $region47: #{tpu_custom_call.1} parent=39 // pred_region
          %295 = dma.done %s288, 896
        $region48: #{tpu_custom_call.1} parent=39 // pred_fallthru
          _
        %s296 = sand.u32 %s26, 1
        %s297 = scalar_lea.sflag [#allocation6], %s296
        %s298 = sand.u32 %s90, 1
        %s299 = smul.addr %s298, 56
        %s300 = scalar_lea.vmem [#allocation7], %s299
        // Predicated region
        $region49: #{tpu_custom_call.1} parent=39 // pred_check
          %p301 = pneg %p103
        $region50: #{tpu_custom_call.1} parent=39 // pred_check_branch
          %303 = sbr.rel (%p301) target = $region52
        $region51: #{tpu_custom_call.1} parent=39 // pred_region
          %304 = dma.done %s297, 896
        $region52: #{tpu_custom_call.1} parent=39 // pred_fallthru
          _
        // Predicated region
        $region53: #{tpu_custom_call.1} parent=39 // pred_check
          %p305 = pneg %p124
        $region54: #{tpu_custom_call.1} parent=39 // pred_check_branch
          %307 = sbr.rel (%p305) target = $region56
        $region55: #{tpu_custom_call.1} parent=39 // pred_region
          %308 = dma.done [#allocation9], 2048
        $region56: #{tpu_custom_call.1} parent=39 // pred_fallthru
          _
        %s309 = sand.u32 %s34, 1
        %s310 = scalar_lea.sflag [#allocation3], %s309
        %s311 = sand.u32 %s34, 1
        %s312 = smul.addr %s311, 56
        %s313 = scalar_lea.vmem [#allocation2], %s312
        %p314 = pneg %p47
        %p315 = pneg %p44
        %s316 = sand.u32 %s26, 1
        %s317 = scalar_lea.sflag [#allocation6], %s316
        %s318 = sand.u32 %s62, 1
        %s319 = smul.addr %s318, 56
        %s320 = scalar_lea.vmem [#allocation5], %s319
        %p321 = pneg %p75
        %p322 = pneg %p72
        %s323 = sand.u32 %s26, 1
        %s324 = scalar_lea.sflag [#allocation6], %s323
        %s325 = sand.u32 %s90, 1
        %s326 = smul.addr %s325, 56
        %s327 = scalar_lea.vmem [#allocation7], %s326
        %p328 = pneg %p103
        %p329 = pneg %p100
        %p330 = pneg %p124
        %p331 = pneg %p121
        %p332 = pneg %p145
        %p333 = pneg %p142
        %p334 = pneg %p171
        %p335 = pneg %p168
        %s336 = sand.u32 %s158, 1
        %s337 = scalar_lea.sflag [#allocation4], %s336
        %s338 = sand.u32 %s158, 1
        %s339 = smul.addr %s338, 192
        %s340 = scalar_lea.vmem [#allocation10], %s339
        %s341 = sadd.s32 %s26, 1
        %s342 = sadd.s32 %s26, 2
        %v344 = vld [vmem:[#allocation8] sm:$0xff]
        %v345 = vld [vmem:[#allocation8 + $0x8] sm:$0xff]
        %v346 = vld [vmem:[#allocation8 + $0x10] sm:$0xff]
        %v347 = vld [vmem:[#allocation8 + $0x18] sm:$0xff]
        %v348 = vld [vmem:[#allocation8 + $0x20] sm:$0xff]
        %v349 = vld [vmem:[#allocation8 + $0x28] sm:$0xff]
        %v350 = vld [vmem:[#allocation8 + $0x30] sm:$0xff]
        %v351 = vld [vmem:[#allocation8 + $0x38] sm:$0xff]
        %v352 = vld [vmem:[#allocation8 + $0x40] sm:$0xff]
        %v353 = vld [vmem:[#allocation8 + $0x48] sm:$0xff]
        %v354 = vld [vmem:[#allocation8 + $0x50] sm:$0xff]
        %v355 = vld [vmem:[#allocation8 + $0x58] sm:$0xff]
        %v356 = vld [vmem:[#allocation8 + $0x60] sm:$0xff]
        %v357 = vld [vmem:[#allocation8 + $0x68] sm:$0xff]
        %v358 = vld [vmem:[#allocation8 + $0x70] sm:$0xff]
        %v359 = vld [vmem:[#allocation8 + $0x78] sm:$0xff]
        %v360 = vld [vmem:[%s4] sm:$0xff]
        %v361 = vld [vmem:[%s4 + $0x8] sm:$0xff]
        %v362 = vld [vmem:[%s4 + $0x10] sm:$0xff]
        %v363 = vld [vmem:[%s4 + $0x18] sm:$0xff]
        %v364 = vld [vmem:[%s4 + $0x20] sm:$0xff]
        %v365 = vld [vmem:[%s4 + $0x28] sm:$0xff]
        %v366 = vld [vmem:[%s4 + $0x30] sm:$0xff]
        %v367 = vld [vmem:[%s4 + $0x38] sm:$0xff]
        %v368 = vld [vmem:[%s282] sm:$0xff]
        %v369 = vld [vmem:[%s282 + $0x8] sm:$0xff]
        %v370 = vld [vmem:[%s282 + $0x10] sm:$0xff]
        %v371 = vld [vmem:[%s282 + $0x18] sm:$0xf]
        %v372 = vld [vmem:[%s282 + $0x1c] sm:$0xff]
        %v373 = vld [vmem:[%s282 + $0x24] sm:$0xff]
        %v374 = vld [vmem:[%s282 + $0x2c] sm:$0xff]
        %v375 = vld [vmem:[%s282 + $0x34] sm:$0xf]
        %v376 = vld [vmem:[%s291] sm:$0xff]
        %v377 = vld [vmem:[%s291 + $0x8] sm:$0xff]
        %v378 = vld [vmem:[%s291 + $0x10] sm:$0xff]
        %v379 = vld [vmem:[%s291 + $0x18] sm:$0xf]
        %v380 = vld [vmem:[%s291 + $0x1c] sm:$0xff]
        %v381 = vld [vmem:[%s291 + $0x24] sm:$0xff]
        %v382 = vld [vmem:[%s291 + $0x2c] sm:$0xff]
        %v383 = vld [vmem:[%s291 + $0x34] sm:$0xf]
        %v384 = vld [vmem:[%s300] sm:$0xff]
        %v385 = vld [vmem:[%s300 + $0x8] sm:$0xff]
        %v386 = vld [vmem:[%s300 + $0x10] sm:$0xff]
        %v387 = vld [vmem:[%s300 + $0x18] sm:$0xf]
        %v388 = vld [vmem:[%s300 + $0x1c] sm:$0xff]
        %v389 = vld [vmem:[%s300 + $0x24] sm:$0xff]
        %v390 = vld [vmem:[%s300 + $0x2c] sm:$0xff]
        %v391 = vld [vmem:[%s300 + $0x34] sm:$0xf]
        %v398 = vunpack.c.l.b16 %v368
        %v399 = vunpack.c.h.b16 %v368
        %v400 = vunpack.c.l.b16 %v369
        %v401 = vunpack.c.h.b16 %v369
        %v402 = vunpack.c.l.b16 %v370
        %v403 = vunpack.c.h.b16 %v370
        %v404 = vunpack.c.l.b16 %v372
        %v405 = vunpack.c.h.b16 %v372
        %v406 = vunpack.c.l.b16 %v373
        %v407 = vunpack.c.h.b16 %v373
        %v408 = vunpack.c.l.b16 %v374
        %v409 = vunpack.c.h.b16 %v374
        %v410 = vpack.c.b16 %v404, %v398
        %v411 = vpack.c.b16 %v405, %v399
        %v412 = vpack.c.b16 %v406, %v400
        %v413 = vpack.c.b16 %v407, %v401
        %v414 = vpack.c.b16 %v408, %v402
        %v415 = vpack.c.b16 %v409, %v403
        %v424 = vunpack.c.l.b16 %v371
        %v425 = vunpack.c.l.b16 %v375
        %v426 = vpack.c.b16 %v425, %v424
        %427 = vrot.lane.b32.xlu0 %v410, 127
        %v428 = vpop.permute.xlu0 %427
        %429 = vrot.lane.b32.xlu0 %v411, 127
        %v430 = vpop.permute.xlu0 %429
        %431 = vrot.lane.b32.xlu0 %v412, 127
        %v432 = vpop.permute.xlu0 %431
        %433 = vrot.lane.b32.xlu0 %v413, 127
        %v434 = vpop.permute.xlu0 %433
        %435 = vrot.lane.b32.xlu0 %v414, 127
        %v436 = vpop.permute.xlu0 %435
        %437 = vrot.lane.b32.xlu0 %v415, 127
        %v438 = vpop.permute.xlu0 %437
        %439 = vrot.lane.b32.xlu0 %v426, 127
        %v440 = vpop.permute.xlu0 %439
        %vm441 = vcmask 1039360
        %v442 = vsel %vm441, %v428, %v430
        %v443 = vsel %vm441, %v430, %v432
        %v444 = vsel %vm441, %v432, %v434
        %v445 = vsel %vm441, %v434, %v436
        %v446 = vsel %vm441, %v436, %v438
        %v447 = vsel %vm441, %v438, %v440
        %454 = vrot.lane.b32.xlu0 %v410, 126
        %v455 = vpop.permute.xlu0 %454
        %456 = vrot.lane.b32.xlu0 %v411, 126
        %v457 = vpop.permute.xlu0 %456
        %458 = vrot.lane.b32.xlu0 %v412, 126
        %v459 = vpop.permute.xlu0 %458
        %460 = vrot.lane.b32.xlu0 %v413, 126
        %v461 = vpop.permute.xlu0 %460
        %462 = vrot.lane.b32.xlu0 %v414, 126
        %v463 = vpop.permute.xlu0 %462
        %464 = vrot.lane.b32.xlu0 %v415, 126
        %v465 = vpop.permute.xlu0 %464
        %466 = vrot.lane.b32.xlu0 %v426, 126
        %v467 = vpop.permute.xlu0 %466
        %vm468 = vcmask 1031168
        %v469 = vsel %vm468, %v455, %v457
        %v470 = vsel %vm468, %v457, %v459
        %v471 = vsel %vm468, %v459, %v461
        %v472 = vsel %vm468, %v461, %v463
        %v473 = vsel %vm468, %v463, %v465
        %v474 = vsel %vm468, %v465, %v467
        %481 = vrot.lane.b32.xlu0 %v410, 110
        %v482 = vpop.permute.xlu0 %481
        %483 = vrot.lane.b32.xlu0 %v411, 110
        %v484 = vpop.permute.xlu0 %483
        %485 = vrot.lane.b32.xlu0 %v412, 110
        %v486 = vpop.permute.xlu0 %485
        %487 = vrot.lane.b32.xlu0 %v413, 110
        %v488 = vpop.permute.xlu0 %487
        %489 = vrot.lane.b32.xlu0 %v414, 110
        %v490 = vpop.permute.xlu0 %489
        %491 = vrot.lane.b32.xlu0 %v415, 110
        %v492 = vpop.permute.xlu0 %491
        %493 = vrot.lane.b32.xlu0 %v426, 110
        %v494 = vpop.permute.xlu0 %493
        %vm495 = vcmask 900096
        %v496 = vsel %vm495, %v482, %v484
        %v497 = vsel %vm495, %v484, %v486
        %v498 = vsel %vm495, %v486, %v488
        %v499 = vsel %vm495, %v488, %v490
        %v500 = vsel %vm495, %v490, %v492
        %v501 = vsel %vm495, %v492, %v494
        %508 = vrot.lane.b32.xlu0 %v410, 109
        %v509 = vpop.permute.xlu0 %508
        %510 = vrot.lane.b32.xlu0 %v411, 109
        %v511 = vpop.permute.xlu0 %510
        %512 = vrot.lane.b32.xlu0 %v412, 109
        %v513 = vpop.permute.xlu0 %512
        %514 = vrot.lane.b32.xlu0 %v413, 109
        %v515 = vpop.permute.xlu0 %514
        %516 = vrot.lane.b32.xlu0 %v414, 109
        %v517 = vpop.permute.xlu0 %516
        %518 = vrot.lane.b32.xlu0 %v415, 109
        %v519 = vpop.permute.xlu0 %518
        %520 = vrot.lane.b32.xlu0 %v426, 109
        %v521 = vpop.permute.xlu0 %520
        %vm522 = vcmask 891904
        %v523 = vsel %vm522, %v509, %v511
        %v524 = vsel %vm522, %v511, %v513
        %v525 = vsel %vm522, %v513, %v515
        %v526 = vsel %vm522, %v515, %v517
        %v527 = vsel %vm522, %v517, %v519
        %v528 = vsel %vm522, %v519, %v521
        %535 = vrot.lane.b32.xlu0 %v410, 108
        %v536 = vpop.permute.xlu0 %535
        %537 = vrot.lane.b32.xlu0 %v411, 108
        %v538 = vpop.permute.xlu0 %537
        %539 = vrot.lane.b32.xlu0 %v412, 108
        %v540 = vpop.permute.xlu0 %539
        %541 = vrot.lane.b32.xlu0 %v413, 108
        %v542 = vpop.permute.xlu0 %541
        %543 = vrot.lane.b32.xlu0 %v414, 108
        %v544 = vpop.permute.xlu0 %543
        %545 = vrot.lane.b32.xlu0 %v415, 108
        %v546 = vpop.permute.xlu0 %545
        %547 = vrot.lane.b32.xlu0 %v426, 108
        %v548 = vpop.permute.xlu0 %547
        %vm549 = vcmask 883712
        %v550 = vsel %vm549, %v536, %v538
        %v551 = vsel %vm549, %v538, %v540
        %v552 = vsel %vm549, %v540, %v542
        %v553 = vsel %vm549, %v542, %v544
        %v554 = vsel %vm549, %v544, %v546
        %v555 = vsel %vm549, %v546, %v548
        %562 = vrot.lane.b32.xlu0 %v410, 92
        %v563 = vpop.permute.xlu0 %562
        %564 = vrot.lane.b32.xlu0 %v411, 92
        %v565 = vpop.permute.xlu0 %564
        %566 = vrot.lane.b32.xlu0 %v412, 92
        %v567 = vpop.permute.xlu0 %566
        %568 = vrot.lane.b32.xlu0 %v413, 92
        %v569 = vpop.permute.xlu0 %568
        %570 = vrot.lane.b32.xlu0 %v414, 92
        %v571 = vpop.permute.xlu0 %570
        %572 = vrot.lane.b32.xlu0 %v415, 92
        %v573 = vpop.permute.xlu0 %572
        %574 = vrot.lane.b32.xlu0 %v426, 92
        %v575 = vpop.permute.xlu0 %574
        %vm576 = vcmask 752640
        %v577 = vsel %vm576, %v563, %v565
        %v578 = vsel %vm576, %v565, %v567
        %v579 = vsel %vm576, %v567, %v569
        %v580 = vsel %vm576, %v569, %v571
        %v581 = vsel %vm576, %v571, %v573
        %v582 = vsel %vm576, %v573, %v575
        %589 = vrot.lane.b32.xlu0 %v410, 91
        %v590 = vpop.permute.xlu0 %589
        %591 = vrot.lane.b32.xlu0 %v411, 91
        %v592 = vpop.permute.xlu0 %591
        %593 = vrot.lane.b32.xlu0 %v412, 91
        %v594 = vpop.permute.xlu0 %593
        %595 = vrot.lane.b32.xlu0 %v413, 91
        %v596 = vpop.permute.xlu0 %595
        %597 = vrot.lane.b32.xlu0 %v414, 91
        %v598 = vpop.permute.xlu0 %597
        %599 = vrot.lane.b32.xlu0 %v415, 91
        %v600 = vpop.permute.xlu0 %599
        %601 = vrot.lane.b32.xlu0 %v426, 91
        %v602 = vpop.permute.xlu0 %601
        %vm603 = vcmask 744448
        %v604 = vsel %vm603, %v590, %v592
        %v605 = vsel %vm603, %v592, %v594
        %v606 = vsel %vm603, %v594, %v596
        %v607 = vsel %vm603, %v596, %v598
        %v608 = vsel %vm603, %v598, %v600
        %v609 = vsel %vm603, %v600, %v602
        %616 = vrot.lane.b32.xlu0 %v410, 90
        %v617 = vpop.permute.xlu0 %616
        %618 = vrot.lane.b32.xlu0 %v411, 90
        %v619 = vpop.permute.xlu0 %618
        %620 = vrot.lane.b32.xlu0 %v412, 90
        %v621 = vpop.permute.xlu0 %620
        %622 = vrot.lane.b32.xlu0 %v413, 90
        %v623 = vpop.permute.xlu0 %622
        %624 = vrot.lane.b32.xlu0 %v414, 90
        %v625 = vpop.permute.xlu0 %624
        %626 = vrot.lane.b32.xlu0 %v415, 90
        %v627 = vpop.permute.xlu0 %626
        %628 = vrot.lane.b32.xlu0 %v426, 90
        %v629 = vpop.permute.xlu0 %628
        %vm630 = vcmask 736256
        %v631 = vsel %vm630, %v617, %v619
        %v632 = vsel %vm630, %v619, %v621
        %v633 = vsel %vm630, %v621, %v623
        %v634 = vsel %vm630, %v623, %v625
        %v635 = vsel %vm630, %v625, %v627
        %v636 = vsel %vm630, %v627, %v629
        %v649 = vunpack.c.l.b16 %v376
        %v650 = vunpack.c.h.b16 %v376
        %v651 = vunpack.c.l.b16 %v377
        %v652 = vunpack.c.h.b16 %v377
        %v653 = vunpack.c.l.b16 %v378
        %v654 = vunpack.c.h.b16 %v378
        %v655 = vunpack.c.l.b16 %v380
        %v656 = vunpack.c.h.b16 %v380
        %v657 = vunpack.c.l.b16 %v381
        %v658 = vunpack.c.h.b16 %v381
        %v659 = vunpack.c.l.b16 %v382
        %v660 = vunpack.c.h.b16 %v382
        %v661 = vpack.c.b16 %v655, %v649
        %v662 = vpack.c.b16 %v656, %v650
        %v663 = vpack.c.b16 %v657, %v651
        %v664 = vpack.c.b16 %v658, %v652
        %v665 = vpack.c.b16 %v659, %v653
        %v666 = vpack.c.b16 %v660, %v654
        %v675 = vunpack.c.l.b16 %v379
        %v676 = vunpack.c.l.b16 %v383
        %v677 = vpack.c.b16 %v676, %v675
        %678 = vrot.lane.b32.xlu0 %v661, 127
        %v679 = vpop.permute.xlu0 %678
        %680 = vrot.lane.b32.xlu0 %v662, 127
        %v681 = vpop.permute.xlu0 %680
        %682 = vrot.lane.b32.xlu0 %v663, 127
        %v683 = vpop.permute.xlu0 %682
        %684 = vrot.lane.b32.xlu0 %v664, 127
        %v685 = vpop.permute.xlu0 %684
        %686 = vrot.lane.b32.xlu0 %v665, 127
        %v687 = vpop.permute.xlu0 %686
        %688 = vrot.lane.b32.xlu0 %v666, 127
        %v689 = vpop.permute.xlu0 %688
        %690 = vrot.lane.b32.xlu0 %v677, 127
        %v691 = vpop.permute.xlu0 %690
        %v692 = vsel %vm441, %v679, %v681
        %v693 = vsel %vm441, %v681, %v683
        %v694 = vsel %vm441, %v683, %v685
        %v695 = vsel %vm441, %v685, %v687
        %v696 = vsel %vm441, %v687, %v689
        %v697 = vsel %vm441, %v689, %v691
        %704 = vrot.lane.b32.xlu0 %v661, 126
        %v705 = vpop.permute.xlu0 %704
        %706 = vrot.lane.b32.xlu0 %v662, 126
        %v707 = vpop.permute.xlu0 %706
        %708 = vrot.lane.b32.xlu0 %v663, 126
        %v709 = vpop.permute.xlu0 %708
        %710 = vrot.lane.b32.xlu0 %v664, 126
        %v711 = vpop.permute.xlu0 %710
        %712 = vrot.lane.b32.xlu0 %v665, 126
        %v713 = vpop.permute.xlu0 %712
        %714 = vrot.lane.b32.xlu0 %v666, 126
        %v715 = vpop.permute.xlu0 %714
        %716 = vrot.lane.b32.xlu0 %v677, 126
        %v717 = vpop.permute.xlu0 %716
        %v718 = vsel %vm468, %v705, %v707
        %v719 = vsel %vm468, %v707, %v709
        %v720 = vsel %vm468, %v709, %v711
        %v721 = vsel %vm468, %v711, %v713
        %v722 = vsel %vm468, %v713, %v715
        %v723 = vsel %vm468, %v715, %v717
        %730 = vrot.lane.b32.xlu0 %v661, 110
        %v731 = vpop.permute.xlu0 %730
        %732 = vrot.lane.b32.xlu0 %v662, 110
        %v733 = vpop.permute.xlu0 %732
        %734 = vrot.lane.b32.xlu0 %v663, 110
        %v735 = vpop.permute.xlu0 %734
        %736 = vrot.lane.b32.xlu0 %v664, 110
        %v737 = vpop.permute.xlu0 %736
        %738 = vrot.lane.b32.xlu0 %v665, 110
        %v739 = vpop.permute.xlu0 %738
        %740 = vrot.lane.b32.xlu0 %v666, 110
        %v741 = vpop.permute.xlu0 %740
        %742 = vrot.lane.b32.xlu0 %v677, 110
        %v743 = vpop.permute.xlu0 %742
        %v744 = vsel %vm495, %v731, %v733
        %v745 = vsel %vm495, %v733, %v735
        %v746 = vsel %vm495, %v735, %v737
        %v747 = vsel %vm495, %v737, %v739
        %v748 = vsel %vm495, %v739, %v741
        %v749 = vsel %vm495, %v741, %v743
        %756 = vrot.lane.b32.xlu0 %v661, 109
        %v757 = vpop.permute.xlu0 %756
        %758 = vrot.lane.b32.xlu0 %v662, 109
        %v759 = vpop.permute.xlu0 %758
        %760 = vrot.lane.b32.xlu0 %v663, 109
        %v761 = vpop.permute.xlu0 %760
        %762 = vrot.lane.b32.xlu0 %v664, 109
        %v763 = vpop.permute.xlu0 %762
        %764 = vrot.lane.b32.xlu0 %v665, 109
        %v765 = vpop.permute.xlu0 %764
        %766 = vrot.lane.b32.xlu0 %v666, 109
        %v767 = vpop.permute.xlu0 %766
        %768 = vrot.lane.b32.xlu0 %v677, 109
        %v769 = vpop.permute.xlu0 %768
        %v770 = vsel %vm522, %v757, %v759
        %v771 = vsel %vm522, %v759, %v761
        %v772 = vsel %vm522, %v761, %v763
        %v773 = vsel %vm522, %v763, %v765
        %v774 = vsel %vm522, %v765, %v767
        %v775 = vsel %vm522, %v767, %v769
        %782 = vrot.lane.b32.xlu0 %v661, 108
        %v783 = vpop.permute.xlu0 %782
        %784 = vrot.lane.b32.xlu0 %v662, 108
        %v785 = vpop.permute.xlu0 %784
        %786 = vrot.lane.b32.xlu0 %v663, 108
        %v787 = vpop.permute.xlu0 %786
        %788 = vrot.lane.b32.xlu0 %v664, 108
        %v789 = vpop.permute.xlu0 %788
        %790 = vrot.lane.b32.xlu0 %v665, 108
        %v791 = vpop.permute.xlu0 %790
        %792 = vrot.lane.b32.xlu0 %v666, 108
        %v793 = vpop.permute.xlu0 %792
        %794 = vrot.lane.b32.xlu0 %v677, 108
        %v795 = vpop.permute.xlu0 %794
        %v796 = vsel %vm549, %v783, %v785
        %v797 = vsel %vm549, %v785, %v787
        %v798 = vsel %vm549, %v787, %v789
        %v799 = vsel %vm549, %v789, %v791
        %v800 = vsel %vm549, %v791, %v793
        %v801 = vsel %vm549, %v793, %v795
        %808 = vrot.lane.b32.xlu0 %v661, 92
        %v809 = vpop.permute.xlu0 %808
        %810 = vrot.lane.b32.xlu0 %v662, 92
        %v811 = vpop.permute.xlu0 %810
        %812 = vrot.lane.b32.xlu0 %v663, 92
        %v813 = vpop.permute.xlu0 %812
        %814 = vrot.lane.b32.xlu0 %v664, 92
        %v815 = vpop.permute.xlu0 %814
        %816 = vrot.lane.b32.xlu0 %v665, 92
        %v817 = vpop.permute.xlu0 %816
        %818 = vrot.lane.b32.xlu0 %v666, 92
        %v819 = vpop.permute.xlu0 %818
        %820 = vrot.lane.b32.xlu0 %v677, 92
        %v821 = vpop.permute.xlu0 %820
        %v822 = vsel %vm576, %v809, %v811
        %v823 = vsel %vm576, %v811, %v813
        %v824 = vsel %vm576, %v813, %v815
        %v825 = vsel %vm576, %v815, %v817
        %v826 = vsel %vm576, %v817, %v819
        %v827 = vsel %vm576, %v819, %v821
        %v840 = vunpack.c.l.b16 %v384
        %v841 = vunpack.c.h.b16 %v384
        %v842 = vunpack.c.l.b16 %v385
        %v843 = vunpack.c.h.b16 %v385
        %v844 = vunpack.c.l.b16 %v386
        %v845 = vunpack.c.h.b16 %v386
        %v846 = vunpack.c.l.b16 %v388
        %v847 = vunpack.c.h.b16 %v388
        %v848 = vunpack.c.l.b16 %v389
        %v849 = vunpack.c.h.b16 %v389
        %v850 = vunpack.c.l.b16 %v390
        %v851 = vunpack.c.h.b16 %v390
        %v852 = vpack.c.b16 %v846, %v840
        %v853 = vpack.c.b16 %v847, %v841
        %v854 = vpack.c.b16 %v848, %v842
        %v855 = vpack.c.b16 %v849, %v843
        %v856 = vpack.c.b16 %v850, %v844
        %v857 = vpack.c.b16 %v851, %v845
        %858 = vrot.lane.b32.xlu0 %v852, 37
        %v859 = vpop.permute.xlu0 %858
        %860 = vrot.lane.b32.xlu0 %v853, 37
        %v861 = vpop.permute.xlu0 %860
        %862 = vrot.lane.b32.xlu0 %v854, 37
        %v863 = vpop.permute.xlu0 %862
        %864 = vrot.lane.b32.xlu0 %v855, 37
        %v865 = vpop.permute.xlu0 %864
        %866 = vrot.lane.b32.xlu0 %v856, 37
        %v867 = vpop.permute.xlu0 %866
        %868 = vrot.lane.b32.xlu0 %v857, 37
        %v869 = vpop.permute.xlu0 %868
        %vm870 = vcmask 302080
        %v871 = vsel %vm870, %v859, %v861
        %v872 = vsel %vm870, %v861, %v863
        %v873 = vsel %vm870, %v863, %v865
        %v874 = vsel %vm870, %v865, %v867
        %v875 = vsel %vm870, %v867, %v869
        %v878 = vunpack.c.l.b16 %v387
        %v879 = vunpack.c.l.b16 %v391
        %v880 = vpack.c.b16 %v879, %v878
        %881 = vrot.lane.b32.xlu0 %v852, 36
        %v882 = vpop.permute.xlu0 %881
        %883 = vrot.lane.b32.xlu0 %v853, 36
        %v884 = vpop.permute.xlu0 %883
        %885 = vrot.lane.b32.xlu0 %v854, 36
        %v886 = vpop.permute.xlu0 %885
        %887 = vrot.lane.b32.xlu0 %v855, 36
        %v888 = vpop.permute.xlu0 %887
        %889 = vrot.lane.b32.xlu0 %v856, 36
        %v890 = vpop.permute.xlu0 %889
        %891 = vrot.lane.b32.xlu0 %v857, 36
        %v892 = vpop.permute.xlu0 %891
        %893 = vrot.lane.b32.xlu0 %v880, 36
        %v894 = vpop.permute.xlu0 %893
        %vm895 = vcmask 293888
        %v896 = vsel %vm895, %v882, %v884
        %v897 = vsel %vm895, %v884, %v886
        %v898 = vsel %vm895, %v886, %v888
        %v899 = vsel %vm895, %v888, %v890
        %v900 = vsel %vm895, %v890, %v892
        %v901 = vsel %vm895, %v892, %v894
        %902 = vrot.lane.b32.xlu0 %v852, 35
        %v903 = vpop.permute.xlu0 %902
        %904 = vrot.lane.b32.xlu0 %v853, 35
        %v905 = vpop.permute.xlu0 %904
        %906 = vrot.lane.b32.xlu0 %v854, 35
        %v907 = vpop.permute.xlu0 %906
        %908 = vrot.lane.b32.xlu0 %v855, 35
        %v909 = vpop.permute.xlu0 %908
        %910 = vrot.lane.b32.xlu0 %v856, 35
        %v911 = vpop.permute.xlu0 %910
        %912 = vrot.lane.b32.xlu0 %v857, 35
        %v913 = vpop.permute.xlu0 %912
        %914 = vrot.lane.b32.xlu0 %v880, 35
        %v915 = vpop.permute.xlu0 %914
        %vm916 = vcmask 285696
        %v917 = vsel %vm916, %v903, %v905
        %v918 = vsel %vm916, %v905, %v907
        %v919 = vsel %vm916, %v907, %v909
        %v920 = vsel %vm916, %v909, %v911
        %v921 = vsel %vm916, %v911, %v913
        %v922 = vsel %vm916, %v913, %v915
        %923 = vrot.lane.b32.xlu0 %v852, 19
        %v924 = vpop.permute.xlu0 %923
        %925 = vrot.lane.b32.xlu0 %v853, 19
        %v926 = vpop.permute.xlu0 %925
        %927 = vrot.lane.b32.xlu0 %v854, 19
        %v928 = vpop.permute.xlu0 %927
        %929 = vrot.lane.b32.xlu0 %v855, 19
        %v930 = vpop.permute.xlu0 %929
        %931 = vrot.lane.b32.xlu0 %v856, 19
        %v932 = vpop.permute.xlu0 %931
        %933 = vrot.lane.b32.xlu0 %v857, 19
        %v934 = vpop.permute.xlu0 %933
        %935 = vrot.lane.b32.xlu0 %v880, 19
        %v936 = vpop.permute.xlu0 %935
        %vm937 = vcmask 154624
        %v938 = vsel %vm937, %v924, %v926
        %v939 = vsel %vm937, %v926, %v928
        %v940 = vsel %vm937, %v928, %v930
        %v941 = vsel %vm937, %v930, %v932
        %v942 = vsel %vm937, %v932, %v934
        %v943 = vsel %vm937, %v934, %v936
        %944 = vrot.lane.b32.xlu0 %v852, 18
        %v945 = vpop.permute.xlu0 %944
        %946 = vrot.lane.b32.xlu0 %v853, 18
        %v947 = vpop.permute.xlu0 %946
        %948 = vrot.lane.b32.xlu0 %v854, 18
        %v949 = vpop.permute.xlu0 %948
        %950 = vrot.lane.b32.xlu0 %v855, 18
        %v951 = vpop.permute.xlu0 %950
        %952 = vrot.lane.b32.xlu0 %v856, 18
        %v953 = vpop.permute.xlu0 %952
        %954 = vrot.lane.b32.xlu0 %v857, 18
        %v955 = vpop.permute.xlu0 %954
        %956 = vrot.lane.b32.xlu0 %v880, 18
        %v957 = vpop.permute.xlu0 %956
        %vm958 = vcmask 146432
        %v959 = vsel %vm958, %v945, %v947
        %v960 = vsel %vm958, %v947, %v949
        %v961 = vsel %vm958, %v949, %v951
        %v962 = vsel %vm958, %v951, %v953
        %v963 = vsel %vm958, %v953, %v955
        %v964 = vsel %vm958, %v955, %v957
        %965 = vrot.lane.b32.xlu0 %v852, 17
        %v966 = vpop.permute.xlu0 %965
        %967 = vrot.lane.b32.xlu0 %v853, 17
        %v968 = vpop.permute.xlu0 %967
        %969 = vrot.lane.b32.xlu0 %v854, 17
        %v970 = vpop.permute.xlu0 %969
        %971 = vrot.lane.b32.xlu0 %v855, 17
        %v972 = vpop.permute.xlu0 %971
        %973 = vrot.lane.b32.xlu0 %v856, 17
        %v974 = vpop.permute.xlu0 %973
        %975 = vrot.lane.b32.xlu0 %v857, 17
        %v976 = vpop.permute.xlu0 %975
        %977 = vrot.lane.b32.xlu0 %v880, 17
        %v978 = vpop.permute.xlu0 %977
        %vm979 = vcmask 138240
        %v980 = vsel %vm979, %v966, %v968
        %v981 = vsel %vm979, %v968, %v970
        %v982 = vsel %vm979, %v970, %v972
        %v983 = vsel %vm979, %v972, %v974
        %v984 = vsel %vm979, %v974, %v976
        %v985 = vsel %vm979, %v976, %v978
        %986 = vrot.lane.b32.xlu0 %v852, 1
        %v987 = vpop.permute.xlu0 %986
        %988 = vrot.lane.b32.xlu0 %v853, 1
        %v989 = vpop.permute.xlu0 %988
        %990 = vrot.lane.b32.xlu0 %v854, 1
        %v991 = vpop.permute.xlu0 %990
        %992 = vrot.lane.b32.xlu0 %v855, 1
        %v993 = vpop.permute.xlu0 %992
        %994 = vrot.lane.b32.xlu0 %v856, 1
        %v995 = vpop.permute.xlu0 %994
        %996 = vrot.lane.b32.xlu0 %v857, 1
        %v997 = vpop.permute.xlu0 %996
        %998 = vrot.lane.b32.xlu0 %v880, 1
        %v999 = vpop.permute.xlu0 %998
        %vm1000 = vcmask 7168
        %v1001 = vsel %vm1000, %v987, %v989
        %v1002 = vsel %vm1000, %v989, %v991
        %v1003 = vsel %vm1000, %v991, %v993
        %v1004 = vsel %vm1000, %v993, %v995
        %v1005 = vsel %vm1000, %v995, %v997
        %v1006 = vsel %vm1000, %v997, %v999
        %1007 = vrot.lane.b32.xlu0 %v852, 127
        %v1008 = vpop.permute.xlu0 %1007
        %1009 = vrot.lane.b32.xlu0 %v853, 127
        %v1010 = vpop.permute.xlu0 %1009
        %1011 = vrot.lane.b32.xlu0 %v854, 127
        %v1012 = vpop.permute.xlu0 %1011
        %1013 = vrot.lane.b32.xlu0 %v855, 127
        %v1014 = vpop.permute.xlu0 %1013
        %1015 = vrot.lane.b32.xlu0 %v856, 127
        %v1016 = vpop.permute.xlu0 %1015
        %1017 = vrot.lane.b32.xlu0 %v857, 127
        %v1018 = vpop.permute.xlu0 %1017
        %1019 = vrot.lane.b32.xlu0 %v880, 127
        %v1020 = vpop.permute.xlu0 %1019
        %v1021 = vsel %vm441, %v1008, %v1010
        %v1022 = vsel %vm441, %v1010, %v1012
        %v1023 = vsel %vm441, %v1012, %v1014
        %v1024 = vsel %vm441, %v1014, %v1016
        %v1025 = vsel %vm441, %v1016, %v1018
        %v1026 = vsel %vm441, %v1018, %v1020
        %1027 = vrot.lane.b32.xlu0 %v661, 91
        %v1028 = vpop.permute.xlu0 %1027
        %1029 = vrot.lane.b32.xlu0 %v662, 91
        %v1030 = vpop.permute.xlu0 %1029
        %1031 = vrot.lane.b32.xlu0 %v663, 91
        %v1032 = vpop.permute.xlu0 %1031
        %1033 = vrot.lane.b32.xlu0 %v664, 91
        %v1034 = vpop.permute.xlu0 %1033
        %1035 = vrot.lane.b32.xlu0 %v665, 91
        %v1036 = vpop.permute.xlu0 %1035
        %1037 = vrot.lane.b32.xlu0 %v666, 91
        %v1038 = vpop.permute.xlu0 %1037
        %1039 = vrot.lane.b32.xlu0 %v677, 91
        %v1040 = vpop.permute.xlu0 %1039
        %1041 = vrot.lane.b32.xlu0 %v692, 91
        %v1042 = vpop.permute.xlu0 %1041
        %1043 = vrot.lane.b32.xlu0 %v693, 91
        %v1044 = vpop.permute.xlu0 %1043
        %1045 = vrot.lane.b32.xlu0 %v694, 91
        %v1046 = vpop.permute.xlu0 %1045
        %1047 = vrot.lane.b32.xlu0 %v695, 91
        %v1048 = vpop.permute.xlu0 %1047
        %1049 = vrot.lane.b32.xlu0 %v696, 91
        %v1050 = vpop.permute.xlu0 %1049
        %1051 = vrot.lane.b32.xlu0 %v697, 91
        %v1052 = vpop.permute.xlu0 %1051
        %1053 = vrot.lane.b32.xlu0 %v691, 91
        %v1054 = vpop.permute.xlu0 %1053
        %1055 = vrot.lane.b32.xlu0 %v859, 91
        %v1056 = vpop.permute.xlu0 %1055
        %1057 = vrot.lane.b32.xlu0 %v871, 91
        %v1058 = vpop.permute.xlu0 %1057
        %1059 = vrot.lane.b32.xlu0 %v872, 91
        %v1060 = vpop.permute.xlu0 %1059
        %1061 = vrot.lane.b32.xlu0 %v873, 91
        %v1062 = vpop.permute.xlu0 %1061
        %1063 = vrot.lane.b32.xlu0 %v874, 91
        %v1064 = vpop.permute.xlu0 %1063
        %1065 = vrot.lane.b32.xlu0 %v875, 91
        %v1066 = vpop.permute.xlu0 %1065
        %1067 = vrot.lane.b32.xlu0 %v869, 91
        %v1068 = vpop.permute.xlu0 %1067
        %1069 = vrot.lane.b32.xlu0 %v882, 91
        %v1070 = vpop.permute.xlu0 %1069
        %1071 = vrot.lane.b32.xlu0 %v896, 91
        %v1072 = vpop.permute.xlu0 %1071
        %1073 = vrot.lane.b32.xlu0 %v897, 91
        %v1074 = vpop.permute.xlu0 %1073
        %1075 = vrot.lane.b32.xlu0 %v898, 91
        %v1076 = vpop.permute.xlu0 %1075
        %1077 = vrot.lane.b32.xlu0 %v899, 91
        %v1078 = vpop.permute.xlu0 %1077
        %1079 = vrot.lane.b32.xlu0 %v900, 91
        %v1080 = vpop.permute.xlu0 %1079
        %1081 = vrot.lane.b32.xlu0 %v901, 91
        %v1082 = vpop.permute.xlu0 %1081
        %1083 = vrot.lane.b32.xlu0 %v903, 91
        %v1084 = vpop.permute.xlu0 %1083
        %1085 = vrot.lane.b32.xlu0 %v917, 91
        %v1086 = vpop.permute.xlu0 %1085
        %1087 = vrot.lane.b32.xlu0 %v918, 91
        %v1088 = vpop.permute.xlu0 %1087
        %1089 = vrot.lane.b32.xlu0 %v919, 91
        %v1090 = vpop.permute.xlu0 %1089
        %1091 = vrot.lane.b32.xlu0 %v920, 91
        %v1092 = vpop.permute.xlu0 %1091
        %1093 = vrot.lane.b32.xlu0 %v921, 91
        %v1094 = vpop.permute.xlu0 %1093
        %1095 = vrot.lane.b32.xlu0 %v922, 91
        %v1096 = vpop.permute.xlu0 %1095
        %1097 = vrot.lane.b32.xlu0 %v924, 91
        %v1098 = vpop.permute.xlu0 %1097
        %1099 = vrot.lane.b32.xlu0 %v938, 91
        %v1100 = vpop.permute.xlu0 %1099
        %1101 = vrot.lane.b32.xlu0 %v939, 91
        %v1102 = vpop.permute.xlu0 %1101
        %1103 = vrot.lane.b32.xlu0 %v940, 91
        %v1104 = vpop.permute.xlu0 %1103
        %1105 = vrot.lane.b32.xlu0 %v941, 91
        %v1106 = vpop.permute.xlu0 %1105
        %1107 = vrot.lane.b32.xlu0 %v942, 91
        %v1108 = vpop.permute.xlu0 %1107
        %1109 = vrot.lane.b32.xlu0 %v943, 91
        %v1110 = vpop.permute.xlu0 %1109
        %1111 = vrot.lane.b32.xlu0 %v945, 91
        %v1112 = vpop.permute.xlu0 %1111
        %1113 = vrot.lane.b32.xlu0 %v959, 91
        %v1114 = vpop.permute.xlu0 %1113
        %1115 = vrot.lane.b32.xlu0 %v960, 91
        %v1116 = vpop.permute.xlu0 %1115
        %1117 = vrot.lane.b32.xlu0 %v961, 91
        %v1118 = vpop.permute.xlu0 %1117
        %1119 = vrot.lane.b32.xlu0 %v962, 91
        %v1120 = vpop.permute.xlu0 %1119
        %1121 = vrot.lane.b32.xlu0 %v963, 91
        %v1122 = vpop.permute.xlu0 %1121
        %1123 = vrot.lane.b32.xlu0 %v964, 91
        %v1124 = vpop.permute.xlu0 %1123
        %1125 = vrot.lane.b32.xlu0 %v966, 91
        %v1126 = vpop.permute.xlu0 %1125
        %1127 = vrot.lane.b32.xlu0 %v980, 91
        %v1128 = vpop.permute.xlu0 %1127
        %1129 = vrot.lane.b32.xlu0 %v981, 91
        %v1130 = vpop.permute.xlu0 %1129
        %1131 = vrot.lane.b32.xlu0 %v982, 91
        %v1132 = vpop.permute.xlu0 %1131
        %1133 = vrot.lane.b32.xlu0 %v983, 91
        %v1134 = vpop.permute.xlu0 %1133
        %1135 = vrot.lane.b32.xlu0 %v984, 91
        %v1136 = vpop.permute.xlu0 %1135
        %1137 = vrot.lane.b32.xlu0 %v985, 91
        %v1138 = vpop.permute.xlu0 %1137
        %1139 = vrot.lane.b32.xlu0 %v987, 91
        %v1140 = vpop.permute.xlu0 %1139
        %1141 = vrot.lane.b32.xlu0 %v1001, 91
        %v1142 = vpop.permute.xlu0 %1141
        %1143 = vrot.lane.b32.xlu0 %v1002, 91
        %v1144 = vpop.permute.xlu0 %1143
        %1145 = vrot.lane.b32.xlu0 %v1003, 91
        %v1146 = vpop.permute.xlu0 %1145
        %1147 = vrot.lane.b32.xlu0 %v1004, 91
        %v1148 = vpop.permute.xlu0 %1147
        %1149 = vrot.lane.b32.xlu0 %v1005, 91
        %v1150 = vpop.permute.xlu0 %1149
        %1151 = vrot.lane.b32.xlu0 %v1006, 91
        %v1152 = vpop.permute.xlu0 %1151
        %1153 = vrot.lane.b32.xlu0 %v852, 91
        %v1154 = vpop.permute.xlu0 %1153
        %1155 = vrot.lane.b32.xlu0 %v853, 91
        %v1156 = vpop.permute.xlu0 %1155
        %1157 = vrot.lane.b32.xlu0 %v854, 91
        %v1158 = vpop.permute.xlu0 %1157
        %1159 = vrot.lane.b32.xlu0 %v855, 91
        %v1160 = vpop.permute.xlu0 %1159
        %1161 = vrot.lane.b32.xlu0 %v856, 91
        %v1162 = vpop.permute.xlu0 %1161
        %1163 = vrot.lane.b32.xlu0 %v857, 91
        %v1164 = vpop.permute.xlu0 %1163
        %1165 = vrot.lane.b32.xlu0 %v880, 91
        %v1166 = vpop.permute.xlu0 %1165
        %1167 = vrot.lane.b32.xlu0 %v1021, 91
        %v1168 = vpop.permute.xlu0 %1167
        %1169 = vrot.lane.b32.xlu0 %v1022, 91
        %v1170 = vpop.permute.xlu0 %1169
        %1171 = vrot.lane.b32.xlu0 %v1023, 91
        %v1172 = vpop.permute.xlu0 %1171
        %1173 = vrot.lane.b32.xlu0 %v1024, 91
        %v1174 = vpop.permute.xlu0 %1173
        %1175 = vrot.lane.b32.xlu0 %v1025, 91
        %v1176 = vpop.permute.xlu0 %1175
        %1177 = vrot.lane.b32.xlu0 %v1026, 91
        %v1178 = vpop.permute.xlu0 %1177
        %1179 = vrot.lane.b32.xlu0 %v1020, 91
        %v1180 = vpop.permute.xlu0 %1179
        %v1181 = vsel %vm603, %v1028, %v1030
        %v1182 = vsel %vm603, %v1030, %v1032
        %v1183 = vsel %vm603, %v1032, %v1034
        %v1184 = vsel %vm603, %v1034, %v1036
        %v1185 = vsel %vm603, %v1036, %v1038
        %v1186 = vsel %vm603, %v1038, %v1040
        %v1187 = vsel %vm603, %v1042, %v1044
        %v1188 = vsel %vm603, %v1044, %v1046
        %v1189 = vsel %vm603, %v1046, %v1048
        %v1190 = vsel %vm603, %v1048, %v1050
        %v1191 = vsel %vm603, %v1050, %v1052
        %v1192 = vsel %vm603, %v1052, %v1054
        %v1193 = vsel %vm603, %v1056, %v1058
        %v1194 = vsel %vm603, %v1058, %v1060
        %v1195 = vsel %vm603, %v1060, %v1062
        %v1196 = vsel %vm603, %v1062, %v1064
        %v1197 = vsel %vm603, %v1064, %v1066
        %v1198 = vsel %vm603, %v1066, %v1068
        %v1199 = vsel %vm603, %v1070, %v1072
        %v1200 = vsel %vm603, %v1072, %v1074
        %v1201 = vsel %vm603, %v1074, %v1076
        %v1202 = vsel %vm603, %v1076, %v1078
        %v1203 = vsel %vm603, %v1078, %v1080
        %v1204 = vsel %vm603, %v1080, %v1082
        %v1205 = vsel %vm603, %v1084, %v1086
        %v1206 = vsel %vm603, %v1086, %v1088
        %v1207 = vsel %vm603, %v1088, %v1090
        %v1208 = vsel %vm603, %v1090, %v1092
        %v1209 = vsel %vm603, %v1092, %v1094
        %v1210 = vsel %vm603, %v1094, %v1096
        %v1211 = vsel %vm603, %v1098, %v1100
        %v1212 = vsel %vm603, %v1100, %v1102
        %v1213 = vsel %vm603, %v1102, %v1104
        %v1214 = vsel %vm603, %v1104, %v1106
        %v1215 = vsel %vm603, %v1106, %v1108
        %v1216 = vsel %vm603, %v1108, %v1110
        %v1217 = vsel %vm603, %v1112, %v1114
        %v1218 = vsel %vm603, %v1114, %v1116
        %v1219 = vsel %vm603, %v1116, %v1118
        %v1220 = vsel %vm603, %v1118, %v1120
        %v1221 = vsel %vm603, %v1120, %v1122
        %v1222 = vsel %vm603, %v1122, %v1124
        %v1223 = vsel %vm603, %v1126, %v1128
        %v1224 = vsel %vm603, %v1128, %v1130
        %v1225 = vsel %vm603, %v1130, %v1132
        %v1226 = vsel %vm603, %v1132, %v1134
        %v1227 = vsel %vm603, %v1134, %v1136
        %v1228 = vsel %vm603, %v1136, %v1138
        %v1229 = vsel %vm603, %v1140, %v1142
        %v1230 = vsel %vm603, %v1142, %v1144
        %v1231 = vsel %vm603, %v1144, %v1146
        %v1232 = vsel %vm603, %v1146, %v1148
        %v1233 = vsel %vm603, %v1148, %v1150
        %v1234 = vsel %vm603, %v1150, %v1152
        %v1235 = vsel %vm603, %v1154, %v1156
        %v1236 = vsel %vm603, %v1156, %v1158
        %v1237 = vsel %vm603, %v1158, %v1160
        %v1238 = vsel %vm603, %v1160, %v1162
        %v1239 = vsel %vm603, %v1162, %v1164
        %v1240 = vsel %vm603, %v1164, %v1166
        %v1241 = vsel %vm603, %v1168, %v1170
        %v1242 = vsel %vm603, %v1170, %v1172
        %v1243 = vsel %vm603, %v1172, %v1174
        %v1244 = vsel %vm603, %v1174, %v1176
        %v1245 = vsel %vm603, %v1176, %v1178
        %v1246 = vsel %vm603, %v1178, %v1180
        %1314 = vset.pattern.permute.xlu0 0
        %1315 = vperm.xlu0 %1314, %v360
        %v1316 = vpop.permute.xlu0 %1315
        %1319 = vset.pattern.permute.xlu0 0
        %1320 = vperm.xlu0 %1319, %v361
        %v1321 = vpop.permute.xlu0 %1320
        %1324 = vset.pattern.permute.xlu0 0
        %1325 = vperm.xlu0 %1324, %v362
        %v1326 = vpop.permute.xlu0 %1325
        %1329 = vset.pattern.permute.xlu0 0
        %1330 = vperm.xlu0 %1329, %v363
        %v1331 = vpop.permute.xlu0 %1330
        %1334 = vset.pattern.permute.xlu0 0
        %1335 = vperm.xlu0 %1334, %v364
        %v1336 = vpop.permute.xlu0 %1335
        %1339 = vset.pattern.permute.xlu0 0
        %1340 = vperm.xlu0 %1339, %v365
        %v1341 = vpop.permute.xlu0 %1340
        %1344 = vset.pattern.permute.xlu0 0
        %1345 = vperm.xlu0 %1344, %v366
        %v1346 = vpop.permute.xlu0 %1345
        %1349 = vset.pattern.permute.xlu0 0
        %1350 = vperm.xlu0 %1349, %v367
        %v1351 = vpop.permute.xlu0 %1350
        %v1369 = vunpack.c.l.b16 %v344
        %v1370 = vunpack.c.h.b16 %v344
        %v1371 = vunpack.c.l.b16 %v345
        %v1372 = vunpack.c.h.b16 %v345
        %v1373 = vunpack.c.l.b16 %v346
        %v1374 = vunpack.c.h.b16 %v346
        %v1375 = vunpack.c.l.b16 %v347
        %v1376 = vunpack.c.h.b16 %v347
        %v1377 = vunpack.c.l.b16 %v348
        %v1378 = vunpack.c.h.b16 %v348
        %v1379 = vunpack.c.l.b16 %v349
        %v1380 = vunpack.c.h.b16 %v349
        %v1381 = vunpack.c.l.b16 %v350
        %v1382 = vunpack.c.h.b16 %v350
        %v1383 = vunpack.c.l.b16 %v351
        %v1384 = vunpack.c.h.b16 %v351
        %v1385 = vunpack.c.l.b16 %v352
        %v1386 = vunpack.c.h.b16 %v352
        %v1387 = vunpack.c.l.b16 %v353
        %v1388 = vunpack.c.h.b16 %v353
        %v1389 = vunpack.c.l.b16 %v354
        %v1390 = vunpack.c.h.b16 %v354
        %v1391 = vunpack.c.l.b16 %v355
        %v1392 = vunpack.c.h.b16 %v355
        %v1393 = vunpack.c.l.b16 %v356
        %v1394 = vunpack.c.h.b16 %v356
        %v1395 = vunpack.c.l.b16 %v357
        %v1396 = vunpack.c.h.b16 %v357
        %v1397 = vunpack.c.l.b16 %v358
        %v1398 = vunpack.c.h.b16 %v358
        %v1399 = vunpack.c.l.b16 %v359
        %v1400 = vunpack.c.h.b16 %v359
        %v1401 = vpack.c.b16 %v1373, %v1369
        %v1402 = vpack.c.b16 %v1374, %v1370
        %v1403 = vpack.c.b16 %v1375, %v1371
        %v1404 = vpack.c.b16 %v1376, %v1372
        %v1405 = vpack.c.b16 %v1381, %v1377
        %v1406 = vpack.c.b16 %v1382, %v1378
        %v1407 = vpack.c.b16 %v1383, %v1379
        %v1408 = vpack.c.b16 %v1384, %v1380
        %v1409 = vpack.c.b16 %v1389, %v1385
        %v1410 = vpack.c.b16 %v1390, %v1386
        %v1411 = vpack.c.b16 %v1391, %v1387
        %v1412 = vpack.c.b16 %v1392, %v1388
        %v1413 = vpack.c.b16 %v1397, %v1393
        %v1414 = vpack.c.b16 %v1398, %v1394
        %v1415 = vpack.c.b16 %v1399, %v1395
        %v1416 = vpack.c.b16 %v1400, %v1396
        %vm1429 = vcmask 392192
        %v1431 = vsel %vm1429, %v1404, 0
        %v1434 = vsel %vm1429, %v1408, 0
        %v1437 = vsel %vm1429, %v1412, 0
        %v1440 = vsel %vm1429, %v1416, 0
        %1442 = vmatprep.subr.bf16.mxu0 %v605
        %1443 = vmatpush1.bf16.msra.mxu0 %v604
        %1444 = vmatprep.subr.bf16.mxu0 %v578
        %1445 = vmatpush1.bf16.msra.mxu0 %v577
        %1446 = vmatprep.subr.bf16.mxu0 %v551
        %1447 = vmatpush1.bf16.msra.mxu0 %v550
        %1448 = vmatprep.subr.bf16.mxu0 %v524
        %1449 = vmatpush1.bf16.msra.mxu0 %v523
        %1450 = vmatprep.subr.bf16.mxu0 %v497
        %1451 = vmatpush1.bf16.msra.mxu0 %v496
        %1452 = vmatprep.subr.bf16.mxu0 %v470
        %1453 = vmatpush1.bf16.msra.mxu0 %v469
        %1454 = vmatprep.subr.bf16.mxu0 %v443
        %1455 = vmatpush1.bf16.msra.mxu0 %v442
        %1456 = vmatprep.subr.bf16.mxu0 %v411
        %1457 = vmatpush1.bf16.msra.mxu0 %v410
        %1458 = vmatprep.subr.bf16.mxu0 %v823
        %1459 = vmatpush2.bf16.msra.mxu0 %v822
        %1460 = vmatprep.subr.bf16.mxu0 %v797
        %1461 = vmatpush2.bf16.msra.mxu0 %v796
        %1462 = vmatprep.subr.bf16.mxu0 %v771
        %1463 = vmatpush2.bf16.msra.mxu0 %v770
        %1464 = vmatprep.subr.bf16.mxu0 %v745
        %1465 = vmatpush2.bf16.msra.mxu0 %v744
        %1466 = vmatprep.subr.bf16.mxu0 %v719
        %1467 = vmatpush2.bf16.msra.mxu0 %v718
        %1468 = vmatprep.subr.bf16.mxu0 %v693
        %1469 = vmatpush2.bf16.msra.mxu0 %v692
        %1470 = vmatprep.subr.bf16.mxu0 %v662
        %1471 = vmatpush2.bf16.msra.mxu0 %v661
        %1472 = vmatprep.subr.bf16.mxu0 %v632
        %1473 = vmatpush2.bf16.msra.mxu0 %v631
        %1474 = vmatprep.mubr.bf16.mxu0 %v1402
        %1475 = vmatmul.mubr.bf16.gmra.mxu0 %v1401
        %v1476 = vpop.f32.mrf.mxu0
        %v1477 = vadd.f32 %v1316, %v1476
        %v1478 = vpop.f32.mrf.mxu0
        %v1479 = vadd.f32 %v1316, %v1478
        %v1480 = vpop.f32.mrf.mxu0
        %v1481 = vadd.f32 %v1321, %v1480
        %v1482 = vpop.f32.mrf.mxu0
        %v1483 = vadd.f32 %v1321, %v1482
        %1484 = vmatprep.mubr.bf16.mxu0 %v1406
        %1485 = vmatmul.mubr.bf16.gmra.mxu0 %v1405
        %v1486 = vpop.f32.mrf.mxu0
        %v1487 = vadd.f32 %v1326, %v1486
        %v1488 = vpop.f32.mrf.mxu0
        %v1489 = vadd.f32 %v1326, %v1488
        %v1490 = vpop.f32.mrf.mxu0
        %v1491 = vadd.f32 %v1331, %v1490
        %v1492 = vpop.f32.mrf.mxu0
        %v1493 = vadd.f32 %v1331, %v1492
        %1494 = vmatprep.mubr.bf16.mxu0 %v1410
        %1495 = vmatmul.mubr.bf16.gmra.mxu0 %v1409
        %v1496 = vpop.f32.mrf.mxu0
        %v1497 = vadd.f32 %v1336, %v1496
        %v1498 = vpop.f32.mrf.mxu0
        %v1499 = vadd.f32 %v1336, %v1498
        %v1500 = vpop.f32.mrf.mxu0
        %v1501 = vadd.f32 %v1341, %v1500
        %v1502 = vpop.f32.mrf.mxu0
        %v1503 = vadd.f32 %v1341, %v1502
        %1504 = vmatprep.mubr.bf16.mxu0 %v1414
        %1505 = vmatmul.mubr.bf16.gmra.mxu0 %v1413
        %v1506 = vpop.f32.mrf.mxu0
        %v1507 = vadd.f32 %v1346, %v1506
        %v1508 = vpop.f32.mrf.mxu0
        %v1509 = vadd.f32 %v1346, %v1508
        %v1510 = vpop.f32.mrf.mxu0
        %v1511 = vadd.f32 %v1351, %v1510
        %v1512 = vpop.f32.mrf.mxu0
        %v1513 = vadd.f32 %v1351, %v1512
        %1514 = vdwg.mxu0
        %1515 = vmatprep.subr.bf16.mxu0 %v1224
        %1516 = vmatpush1.bf16.msra.mxu0 %v1223
        %1517 = vmatprep.subr.bf16.mxu0 %v1218
        %1518 = vmatpush1.bf16.msra.mxu0 %v1217
        %1519 = vmatprep.subr.bf16.mxu0 %v1212
        %1520 = vmatpush1.bf16.msra.mxu0 %v1211
        %1521 = vmatprep.subr.bf16.mxu0 %v1206
        %1522 = vmatpush1.bf16.msra.mxu0 %v1205
        %1523 = vmatprep.subr.bf16.mxu0 %v1200
        %1524 = vmatpush1.bf16.msra.mxu0 %v1199
        %1525 = vmatprep.subr.bf16.mxu0 %v1194
        %1526 = vmatpush1.bf16.msra.mxu0 %v1193
        %1527 = vmatprep.subr.bf16.mxu0 %v1188
        %1528 = vmatpush1.bf16.msra.mxu0 %v1187
        %1529 = vmatprep.subr.bf16.mxu0 %v1182
        %1530 = vmatpush1.bf16.msra.mxu0 %v1181
        %1531 = vmatprep.subr.bf16.mxu0 0
        %1532 = vmatpush2.bf16.msra.mxu0 0
        %1533 = vmatprep.subr.bf16.mxu0 0
        %1534 = vmatpush2.bf16.msra.mxu0 0
        %1535 = vmatprep.subr.bf16.mxu0 0
        %1536 = vmatpush2.bf16.msra.mxu0 0
        %1537 = vmatprep.subr.bf16.mxu0 0
        %1538 = vmatpush2.bf16.msra.mxu0 0
        %1539 = vmatprep.subr.bf16.mxu0 0
        %1540 = vmatpush2.bf16.msra.mxu0 0
        %1541 = vmatprep.subr.bf16.mxu0 %v1242
        %1542 = vmatpush2.bf16.msra.mxu0 %v1241
        %1543 = vmatprep.subr.bf16.mxu0 %v1236
        %1544 = vmatpush2.bf16.msra.mxu0 %v1235
        %1545 = vmatprep.subr.bf16.mxu0 %v1230
        %1546 = vmatpush2.bf16.msra.mxu0 %v1229
        %1547 = vmatprep.mubr.bf16.mxu0 %v1431
        %1548 = vmatmul.mubr.bf16.gmra.mxu0 %v1403
        %v1549 = vpop.f32.mrf.mxu0
        %v1550 = vadd.f32 %v1477, %v1549
        %v1551 = vpop.f32.mrf.mxu0
        %v1552 = vadd.f32 %v1479, %v1551
        %v1553 = vpop.f32.mrf.mxu0
        %v1554 = vadd.f32 %v1481, %v1553
        %v1555 = vpop.f32.mrf.mxu0
        %v1556 = vadd.f32 %v1483, %v1555
        %1557 = vmatprep.mubr.bf16.mxu0 %v1434
        %1558 = vmatmul.mubr.bf16.gmra.mxu0 %v1407
        %v1559 = vpop.f32.mrf.mxu0
        %v1560 = vadd.f32 %v1487, %v1559
        %v1561 = vpop.f32.mrf.mxu0
        %v1562 = vadd.f32 %v1489, %v1561
        %v1563 = vpop.f32.mrf.mxu0
        %v1564 = vadd.f32 %v1491, %v1563
        %v1565 = vpop.f32.mrf.mxu0
        %v1566 = vadd.f32 %v1493, %v1565
        %1567 = vmatprep.mubr.bf16.mxu0 %v1437
        %1568 = vmatmul.mubr.bf16.gmra.mxu0 %v1411
        %v1569 = vpop.f32.mrf.mxu0
        %v1570 = vadd.f32 %v1497, %v1569
        %v1571 = vpop.f32.mrf.mxu0
        %v1572 = vadd.f32 %v1499, %v1571
        %v1573 = vpop.f32.mrf.mxu0
        %v1574 = vadd.f32 %v1501, %v1573
        %v1575 = vpop.f32.mrf.mxu0
        %v1576 = vadd.f32 %v1503, %v1575
        %1577 = vmatprep.mubr.bf16.mxu0 %v1440
        %1578 = vmatmul.mubr.bf16.gmra.mxu0 %v1415
        %v1579 = vpop.f32.mrf.mxu0
        %v1580 = vadd.f32 %v1507, %v1579
        %v1581 = vpop.f32.mrf.mxu0
        %v1582 = vadd.f32 %v1509, %v1581
        %v1583 = vpop.f32.mrf.mxu0
        %v1584 = vadd.f32 %v1511, %v1583
        %v1585 = vpop.f32.mrf.mxu0
        %v1586 = vadd.f32 %v1513, %v1585
        %1587 = vdwg.mxu0
        %1588 = vmatprep.subr.bf16.mxu0 %v607
        %1589 = vmatpush1.bf16.msra.mxu0 %v606
        %1590 = vmatprep.subr.bf16.mxu0 %v580
        %1591 = vmatpush1.bf16.msra.mxu0 %v579
        %1592 = vmatprep.subr.bf16.mxu0 %v553
        %1593 = vmatpush1.bf16.msra.mxu0 %v552
        %1594 = vmatprep.subr.bf16.mxu0 %v526
        %1595 = vmatpush1.bf16.msra.mxu0 %v525
        %1596 = vmatprep.subr.bf16.mxu0 %v499
        %1597 = vmatpush1.bf16.msra.mxu0 %v498
        %1598 = vmatprep.subr.bf16.mxu0 %v472
        %1599 = vmatpush1.bf16.msra.mxu0 %v471
        %1600 = vmatprep.subr.bf16.mxu0 %v445
        %1601 = vmatpush1.bf16.msra.mxu0 %v444
        %1602 = vmatprep.subr.bf16.mxu0 %v413
        %1603 = vmatpush1.bf16.msra.mxu0 %v412
        %1604 = vmatprep.subr.bf16.mxu0 %v825
        %1605 = vmatpush2.bf16.msra.mxu0 %v824
        %1606 = vmatprep.subr.bf16.mxu0 %v799
        %1607 = vmatpush2.bf16.msra.mxu0 %v798
        %1608 = vmatprep.subr.bf16.mxu0 %v773
        %1609 = vmatpush2.bf16.msra.mxu0 %v772
        %1610 = vmatprep.subr.bf16.mxu0 %v747
        %1611 = vmatpush2.bf16.msra.mxu0 %v746
        %1612 = vmatprep.subr.bf16.mxu0 %v721
        %1613 = vmatpush2.bf16.msra.mxu0 %v720
        %1614 = vmatprep.subr.bf16.mxu0 %v695
        %1615 = vmatpush2.bf16.msra.mxu0 %v694
        %1616 = vmatprep.subr.bf16.mxu0 %v664
        %1617 = vmatpush2.bf16.msra.mxu0 %v663
        %1618 = vmatprep.subr.bf16.mxu0 %v634
        %1619 = vmatpush2.bf16.msra.mxu0 %v633
        %1620 = vmatprep.mubr.bf16.mxu0 %v1402
        %1621 = vmatmul.mubr.bf16.gmra.mxu0 %v1401
        %v1622 = vpop.f32.mrf.mxu0
        %v1623 = vadd.f32 %v1316, %v1622
        %v1624 = vpop.f32.mrf.mxu0
        %v1625 = vadd.f32 %v1316, %v1624
        %v1626 = vpop.f32.mrf.mxu0
        %v1627 = vadd.f32 %v1321, %v1626
        %v1628 = vpop.f32.mrf.mxu0
        %v1629 = vadd.f32 %v1321, %v1628
        %1630 = vmatprep.mubr.bf16.mxu0 %v1406
        %1631 = vmatmul.mubr.bf16.gmra.mxu0 %v1405
        %v1632 = vpop.f32.mrf.mxu0
        %v1633 = vadd.f32 %v1326, %v1632
        %v1634 = vpop.f32.mrf.mxu0
        %v1635 = vadd.f32 %v1326, %v1634
        %v1636 = vpop.f32.mrf.mxu0
        %v1637 = vadd.f32 %v1331, %v1636
        %v1638 = vpop.f32.mrf.mxu0
        %v1639 = vadd.f32 %v1331, %v1638
        %1640 = vmatprep.mubr.bf16.mxu0 %v1410
        %1641 = vmatmul.mubr.bf16.gmra.mxu0 %v1409
        %v1642 = vpop.f32.mrf.mxu0
        %v1643 = vadd.f32 %v1336, %v1642
        %v1644 = vpop.f32.mrf.mxu0
        %v1645 = vadd.f32 %v1336, %v1644
        %v1646 = vpop.f32.mrf.mxu0
        %v1647 = vadd.f32 %v1341, %v1646
        %v1648 = vpop.f32.mrf.mxu0
        %v1649 = vadd.f32 %v1341, %v1648
        %1650 = vmatprep.mubr.bf16.mxu0 %v1414
        %1651 = vmatmul.mubr.bf16.gmra.mxu0 %v1413
        %v1652 = vpop.f32.mrf.mxu0
        %v1653 = vadd.f32 %v1346, %v1652
        %v1654 = vpop.f32.mrf.mxu0
        %v1655 = vadd.f32 %v1346, %v1654
        %v1656 = vpop.f32.mrf.mxu0
        %v1657 = vadd.f32 %v1351, %v1656
        %v1658 = vpop.f32.mrf.mxu0
        %v1659 = vadd.f32 %v1351, %v1658
        %1660 = vdwg.mxu0
        %1661 = vmatprep.subr.bf16.mxu0 %v1226
        %1662 = vmatpush1.bf16.msra.mxu0 %v1225
        %1663 = vmatprep.subr.bf16.mxu0 %v1220
        %1664 = vmatpush1.bf16.msra.mxu0 %v1219
        %1665 = vmatprep.subr.bf16.mxu0 %v1214
        %1666 = vmatpush1.bf16.msra.mxu0 %v1213
        %1667 = vmatprep.subr.bf16.mxu0 %v1208
        %1668 = vmatpush1.bf16.msra.mxu0 %v1207
        %1669 = vmatprep.subr.bf16.mxu0 %v1202
        %1670 = vmatpush1.bf16.msra.mxu0 %v1201
        %1671 = vmatprep.subr.bf16.mxu0 %v1196
        %1672 = vmatpush1.bf16.msra.mxu0 %v1195
        %1673 = vmatprep.subr.bf16.mxu0 %v1190
        %1674 = vmatpush1.bf16.msra.mxu0 %v1189
        %1675 = vmatprep.subr.bf16.mxu0 %v1184
        %1676 = vmatpush1.bf16.msra.mxu0 %v1183
        %1677 = vmatprep.subr.bf16.mxu0 0
        %1678 = vmatpush2.bf16.msra.mxu0 0
        %1679 = vmatprep.subr.bf16.mxu0 0
        %1680 = vmatpush2.bf16.msra.mxu0 0
        %1681 = vmatprep.subr.bf16.mxu0 0
        %1682 = vmatpush2.bf16.msra.mxu0 0
        %1683 = vmatprep.subr.bf16.mxu0 0
        %1684 = vmatpush2.bf16.msra.mxu0 0
        %1685 = vmatprep.subr.bf16.mxu0 0
        %1686 = vmatpush2.bf16.msra.mxu0 0
        %1687 = vmatprep.subr.bf16.mxu0 %v1244
        %1688 = vmatpush2.bf16.msra.mxu0 %v1243
        %1689 = vmatprep.subr.bf16.mxu0 %v1238
        %1690 = vmatpush2.bf16.msra.mxu0 %v1237
        %1691 = vmatprep.subr.bf16.mxu0 %v1232
        %1692 = vmatpush2.bf16.msra.mxu0 %v1231
        %1693 = vmatprep.mubr.bf16.mxu0 %v1431
        %1694 = vmatmul.mubr.bf16.gmra.mxu0 %v1403
        %v1695 = vpop.f32.mrf.mxu0
        %v1696 = vadd.f32 %v1623, %v1695
        %v1697 = vpop.f32.mrf.mxu0
        %v1698 = vadd.f32 %v1625, %v1697
        %v1699 = vpop.f32.mrf.mxu0
        %v1700 = vadd.f32 %v1627, %v1699
        %v1701 = vpop.f32.mrf.mxu0
        %v1702 = vadd.f32 %v1629, %v1701
        %1703 = vmatprep.mubr.bf16.mxu0 %v1434
        %1704 = vmatmul.mubr.bf16.gmra.mxu0 %v1407
        %v1705 = vpop.f32.mrf.mxu0
        %v1706 = vadd.f32 %v1633, %v1705
        %v1707 = vpop.f32.mrf.mxu0
        %v1708 = vadd.f32 %v1635, %v1707
        %v1709 = vpop.f32.mrf.mxu0
        %v1710 = vadd.f32 %v1637, %v1709
        %v1711 = vpop.f32.mrf.mxu0
        %v1712 = vadd.f32 %v1639, %v1711
        %1713 = vmatprep.mubr.bf16.mxu0 %v1437
        %1714 = vmatmul.mubr.bf16.gmra.mxu0 %v1411
        %v1715 = vpop.f32.mrf.mxu0
        %v1716 = vadd.f32 %v1643, %v1715
        %v1717 = vpop.f32.mrf.mxu0
        %v1718 = vadd.f32 %v1645, %v1717
        %v1719 = vpop.f32.mrf.mxu0
        %v1720 = vadd.f32 %v1647, %v1719
        %v1721 = vpop.f32.mrf.mxu0
        %v1722 = vadd.f32 %v1649, %v1721
        %1723 = vmatprep.mubr.bf16.mxu0 %v1440
        %1724 = vmatmul.mubr.bf16.gmra.mxu0 %v1415
        %v1725 = vpop.f32.mrf.mxu0
        %v1726 = vadd.f32 %v1653, %v1725
        %v1727 = vpop.f32.mrf.mxu0
        %v1728 = vadd.f32 %v1655, %v1727
        %v1729 = vpop.f32.mrf.mxu0
        %v1730 = vadd.f32 %v1657, %v1729
        %v1731 = vpop.f32.mrf.mxu0
        %v1732 = vadd.f32 %v1659, %v1731
        %1733 = vdwg.mxu0
        %1734 = vmatprep.subr.bf16.mxu0 %v609
        %1735 = vmatpush1.bf16.msra.mxu0 %v608
        %1736 = vmatprep.subr.bf16.mxu0 %v582
        %1737 = vmatpush1.bf16.msra.mxu0 %v581
        %1738 = vmatprep.subr.bf16.mxu0 %v555
        %1739 = vmatpush1.bf16.msra.mxu0 %v554
        %1740 = vmatprep.subr.bf16.mxu0 %v528
        %1741 = vmatpush1.bf16.msra.mxu0 %v527
        %1742 = vmatprep.subr.bf16.mxu0 %v501
        %1743 = vmatpush1.bf16.msra.mxu0 %v500
        %1744 = vmatprep.subr.bf16.mxu0 %v474
        %1745 = vmatpush1.bf16.msra.mxu0 %v473
        %1746 = vmatprep.subr.bf16.mxu0 %v447
        %1747 = vmatpush1.bf16.msra.mxu0 %v446
        %1748 = vmatprep.subr.bf16.mxu0 %v415
        %1749 = vmatpush1.bf16.msra.mxu0 %v414
        %1750 = vmatprep.subr.bf16.mxu0 %v827
        %1751 = vmatpush2.bf16.msra.mxu0 %v826
        %1752 = vmatprep.subr.bf16.mxu0 %v801
        %1753 = vmatpush2.bf16.msra.mxu0 %v800
        %1754 = vmatprep.subr.bf16.mxu0 %v775
        %1755 = vmatpush2.bf16.msra.mxu0 %v774
        %1756 = vmatprep.subr.bf16.mxu0 %v749
        %1757 = vmatpush2.bf16.msra.mxu0 %v748
        %1758 = vmatprep.subr.bf16.mxu0 %v723
        %1759 = vmatpush2.bf16.msra.mxu0 %v722
        %1760 = vmatprep.subr.bf16.mxu0 %v697
        %1761 = vmatpush2.bf16.msra.mxu0 %v696
        %1762 = vmatprep.subr.bf16.mxu0 %v666
        %1763 = vmatpush2.bf16.msra.mxu0 %v665
        %1764 = vmatprep.subr.bf16.mxu0 %v636
        %1765 = vmatpush2.bf16.msra.mxu0 %v635
        %1766 = vmatprep.mubr.bf16.mxu0 %v1402
        %1767 = vmatmul.mubr.bf16.gmra.mxu0 %v1401
        %v1768 = vpop.f32.mrf.mxu0
        %v1769 = vadd.f32 %v1316, %v1768
        %v1770 = vpop.f32.mrf.mxu0
        %v1771 = vadd.f32 %v1316, %v1770
        %v1772 = vpop.f32.mrf.mxu0
        %v1773 = vadd.f32 %v1321, %v1772
        %v1774 = vpop.f32.mrf.mxu0
        %v1775 = vadd.f32 %v1321, %v1774
        %1776 = vmatprep.mubr.bf16.mxu0 %v1406
        %1777 = vmatmul.mubr.bf16.gmra.mxu0 %v1405
        %v1778 = vpop.f32.mrf.mxu0
        %v1779 = vadd.f32 %v1326, %v1778
        %v1780 = vpop.f32.mrf.mxu0
        %v1781 = vadd.f32 %v1326, %v1780
        %v1782 = vpop.f32.mrf.mxu0
        %v1783 = vadd.f32 %v1331, %v1782
        %v1784 = vpop.f32.mrf.mxu0
        %v1785 = vadd.f32 %v1331, %v1784
        %1786 = vmatprep.mubr.bf16.mxu0 %v1410
        %1787 = vmatmul.mubr.bf16.gmra.mxu0 %v1409
        %v1788 = vpop.f32.mrf.mxu0
        %v1789 = vadd.f32 %v1336, %v1788
        %v1790 = vpop.f32.mrf.mxu0
        %v1791 = vadd.f32 %v1336, %v1790
        %v1792 = vpop.f32.mrf.mxu0
        %v1793 = vadd.f32 %v1341, %v1792
        %v1794 = vpop.f32.mrf.mxu0
        %v1795 = vadd.f32 %v1341, %v1794
        %1796 = vmatprep.mubr.bf16.mxu0 %v1414
        %1797 = vmatmul.mubr.bf16.gmra.mxu0 %v1413
        %v1798 = vpop.f32.mrf.mxu0
        %v1799 = vadd.f32 %v1346, %v1798
        %v1800 = vpop.f32.mrf.mxu0
        %v1801 = vadd.f32 %v1346, %v1800
        %v1802 = vpop.f32.mrf.mxu0
        %v1803 = vadd.f32 %v1351, %v1802
        %v1804 = vpop.f32.mrf.mxu0
        %v1805 = vadd.f32 %v1351, %v1804
        %1806 = vdwg.mxu0
        %1807 = vmatprep.subr.bf16.mxu0 %v1228
        %1808 = vmatpush1.bf16.msra.mxu0 %v1227
        %1809 = vmatprep.subr.bf16.mxu0 %v1222
        %1810 = vmatpush1.bf16.msra.mxu0 %v1221
        %1811 = vmatprep.subr.bf16.mxu0 %v1216
        %1812 = vmatpush1.bf16.msra.mxu0 %v1215
        %1813 = vmatprep.subr.bf16.mxu0 %v1210
        %1814 = vmatpush1.bf16.msra.mxu0 %v1209
        %1815 = vmatprep.subr.bf16.mxu0 %v1204
        %1816 = vmatpush1.bf16.msra.mxu0 %v1203
        %1817 = vmatprep.subr.bf16.mxu0 %v1198
        %1818 = vmatpush1.bf16.msra.mxu0 %v1197
        %1819 = vmatprep.subr.bf16.mxu0 %v1192
        %1820 = vmatpush1.bf16.msra.mxu0 %v1191
        %1821 = vmatprep.subr.bf16.mxu0 %v1186
        %1822 = vmatpush1.bf16.msra.mxu0 %v1185
        %1823 = vmatprep.subr.bf16.mxu0 0
        %1824 = vmatpush2.bf16.msra.mxu0 0
        %1825 = vmatprep.subr.bf16.mxu0 0
        %1826 = vmatpush2.bf16.msra.mxu0 0
        %1827 = vmatprep.subr.bf16.mxu0 0
        %1828 = vmatpush2.bf16.msra.mxu0 0
        %1829 = vmatprep.subr.bf16.mxu0 0
        %1830 = vmatpush2.bf16.msra.mxu0 0
        %1831 = vmatprep.subr.bf16.mxu0 0
        %1832 = vmatpush2.bf16.msra.mxu0 0
        %1833 = vmatprep.subr.bf16.mxu0 %v1246
        %1834 = vmatpush2.bf16.msra.mxu0 %v1245
        %1835 = vmatprep.subr.bf16.mxu0 %v1240
        %1836 = vmatpush2.bf16.msra.mxu0 %v1239
        %1837 = vmatprep.subr.bf16.mxu0 %v1234
        %1838 = vmatpush2.bf16.msra.mxu0 %v1233
        %1839 = vmatprep.mubr.bf16.mxu0 %v1431
        %1840 = vmatmul.mubr.bf16.gmra.mxu0 %v1403
        %v1841 = vpop.f32.mrf.mxu0
        %v1842 = vadd.f32 %v1769, %v1841
        %v1843 = vpop.f32.mrf.mxu0
        %v1844 = vadd.f32 %v1771, %v1843
        %v1845 = vpop.f32.mrf.mxu0
        %v1846 = vadd.f32 %v1773, %v1845
        %v1847 = vpop.f32.mrf.mxu0
        %v1848 = vadd.f32 %v1775, %v1847
        %1849 = vmatprep.mubr.bf16.mxu0 %v1434
        %1850 = vmatmul.mubr.bf16.gmra.mxu0 %v1407
        %v1851 = vpop.f32.mrf.mxu0
        %v1852 = vadd.f32 %v1779, %v1851
        %v1853 = vpop.f32.mrf.mxu0
        %v1854 = vadd.f32 %v1781, %v1853
        %v1855 = vpop.f32.mrf.mxu0
        %v1856 = vadd.f32 %v1783, %v1855
        %v1857 = vpop.f32.mrf.mxu0
        %v1858 = vadd.f32 %v1785, %v1857
        %1859 = vmatprep.mubr.bf16.mxu0 %v1437
        %1860 = vmatmul.mubr.bf16.gmra.mxu0 %v1411
        %v1861 = vpop.f32.mrf.mxu0
        %v1862 = vadd.f32 %v1789, %v1861
        %v1863 = vpop.f32.mrf.mxu0
        %v1864 = vadd.f32 %v1791, %v1863
        %v1865 = vpop.f32.mrf.mxu0
        %v1866 = vadd.f32 %v1793, %v1865
        %v1867 = vpop.f32.mrf.mxu0
        %v1868 = vadd.f32 %v1795, %v1867
        %1869 = vmatprep.mubr.bf16.mxu0 %v1440
        %1870 = vmatmul.mubr.bf16.gmra.mxu0 %v1415
        %v1871 = vpop.f32.mrf.mxu0
        %v1872 = vadd.f32 %v1799, %v1871
        %v1873 = vpop.f32.mrf.mxu0
        %v1874 = vadd.f32 %v1801, %v1873
        %v1875 = vpop.f32.mrf.mxu0
        %v1876 = vadd.f32 %v1803, %v1875
        %v1877 = vpop.f32.mrf.mxu0
        %v1878 = vadd.f32 %v1805, %v1877
        %1879 = vdwg.mxu0
        %v1880 = vtanh.pop %v1550
        %v1881 = vtanh.pop %v1552
        %v1882 = vtanh.pop %v1696
        %v1883 = vtanh.pop %v1698
        %v1884 = vtanh.pop %v1842
        %v1885 = vtanh.pop %v1844
        %v1886 = vtanh.pop %v1554
        %v1887 = vtanh.pop %v1556
        %v1888 = vtanh.pop %v1700
        %v1889 = vtanh.pop %v1702
        %v1890 = vtanh.pop %v1846
        %v1891 = vtanh.pop %v1848
        %v1892 = vtanh.pop %v1560
        %v1893 = vtanh.pop %v1562
        %v1894 = vtanh.pop %v1706
        %v1895 = vtanh.pop %v1708
        %v1896 = vtanh.pop %v1852
        %v1897 = vtanh.pop %v1854
        %v1898 = vtanh.pop %v1564
        %v1899 = vtanh.pop %v1566
        %v1900 = vtanh.pop %v1710
        %v1901 = vtanh.pop %v1712
        %v1902 = vtanh.pop %v1856
        %v1903 = vtanh.pop %v1858
        %v1904 = vxor.u32 %v1570, 2147483648
        %v1905 = vxor.u32 %v1572, 2147483648
        %v1906 = vxor.u32 %v1716, 2147483648
        %v1907 = vxor.u32 %v1718, 2147483648
        %v1908 = vxor.u32 %v1862, 2147483648
        %v1909 = vxor.u32 %v1864, 2147483648
        %v1910 = vxor.u32 %v1574, 2147483648
        %v1911 = vxor.u32 %v1576, 2147483648
        %v1912 = vxor.u32 %v1720, 2147483648
        %v1913 = vxor.u32 %v1722, 2147483648
        %v1914 = vxor.u32 %v1866, 2147483648
        %v1915 = vxor.u32 %v1868, 2147483648
        %v1916 = vxor.u32 %v1580, 2147483648
        %v1917 = vxor.u32 %v1582, 2147483648
        %v1918 = vxor.u32 %v1726, 2147483648
        %v1919 = vxor.u32 %v1728, 2147483648
        %v1920 = vxor.u32 %v1872, 2147483648
        %v1921 = vxor.u32 %v1874, 2147483648
        %v1922 = vxor.u32 %v1584, 2147483648
        %v1923 = vxor.u32 %v1586, 2147483648
        %v1924 = vxor.u32 %v1730, 2147483648
        %v1925 = vxor.u32 %v1732, 2147483648
        %v1926 = vxor.u32 %v1876, 2147483648
        %v1927 = vxor.u32 %v1878, 2147483648
        %v1928 = vmul.f32 %v1904, 1.442695
        %v1929 = vpow.pop %v1928
        %v1930 = vmul.f32 %v1905, 1.442695
        %v1931 = vpow.pop %v1930
        %v1932 = vmul.f32 %v1906, 1.442695
        %v1933 = vpow.pop %v1932
        %v1934 = vmul.f32 %v1907, 1.442695
        %v1935 = vpow.pop %v1934
        %v1936 = vmul.f32 %v1908, 1.442695
        %v1937 = vpow.pop %v1936
        %v1938 = vmul.f32 %v1909, 1.442695
        %v1939 = vpow.pop %v1938
        %v1940 = vmul.f32 %v1910, 1.442695
        %v1941 = vpow.pop %v1940
        %v1942 = vmul.f32 %v1911, 1.442695
        %v1943 = vpow.pop %v1942
        %v1944 = vmul.f32 %v1912, 1.442695
        %v1945 = vpow.pop %v1944
        %v1946 = vmul.f32 %v1913, 1.442695
        %v1947 = vpow.pop %v1946
        %v1948 = vmul.f32 %v1914, 1.442695
        %v1949 = vpow.pop %v1948
        %v1950 = vmul.f32 %v1915, 1.442695
        %v1951 = vpow.pop %v1950
        %v1952 = vmul.f32 %v1916, 1.442695
        %v1953 = vpow.pop %v1952
        %v1954 = vmul.f32 %v1917, 1.442695
        %v1955 = vpow.pop %v1954
        %v1956 = vmul.f32 %v1918, 1.442695
        %v1957 = vpow.pop %v1956
        %v1958 = vmul.f32 %v1919, 1.442695
        %v1959 = vpow.pop %v1958
        %v1960 = vmul.f32 %v1920, 1.442695
        %v1961 = vpow.pop %v1960
        %v1962 = vmul.f32 %v1921, 1.442695
        %v1963 = vpow.pop %v1962
        %v1964 = vmul.f32 %v1922, 1.442695
        %v1965 = vpow.pop %v1964
        %v1966 = vmul.f32 %v1923, 1.442695
        %v1967 = vpow.pop %v1966
        %v1968 = vmul.f32 %v1924, 1.442695
        %v1969 = vpow.pop %v1968
        %v1970 = vmul.f32 %v1925, 1.442695
        %v1971 = vpow.pop %v1970
        %v1972 = vmul.f32 %v1926, 1.442695
        %v1973 = vpow.pop %v1972
        %v1974 = vmul.f32 %v1927, 1.442695
        %v1975 = vpow.pop %v1974
        %v1976 = vadd.f32 %v1929, 1.0
        %v1977 = vadd.f32 %v1931, 1.0
        %v1978 = vadd.f32 %v1933, 1.0
        %v1979 = vadd.f32 %v1935, 1.0
        %v1980 = vadd.f32 %v1937, 1.0
        %v1981 = vadd.f32 %v1939, 1.0
        %v1982 = vadd.f32 %v1941, 1.0
        %v1983 = vadd.f32 %v1943, 1.0
        %v1984 = vadd.f32 %v1945, 1.0
        %v1985 = vadd.f32 %v1947, 1.0
        %v1986 = vadd.f32 %v1949, 1.0
        %v1987 = vadd.f32 %v1951, 1.0
        %v1988 = vadd.f32 %v1953, 1.0
        %v1989 = vadd.f32 %v1955, 1.0
        %v1990 = vadd.f32 %v1957, 1.0
        %v1991 = vadd.f32 %v1959, 1.0
        %v1992 = vadd.f32 %v1961, 1.0
        %v1993 = vadd.f32 %v1963, 1.0
        %v1994 = vadd.f32 %v1965, 1.0
        %v1995 = vadd.f32 %v1967, 1.0
        %v1996 = vadd.f32 %v1969, 1.0
        %v1997 = vadd.f32 %v1971, 1.0
        %v1998 = vadd.f32 %v1973, 1.0
        %v1999 = vadd.f32 %v1975, 1.0
        %v2000 = vrcp.pop %v1976
        %v2001 = vmul.f32 1.0, %v2000
        %v2002 = vrcp.pop %v1977
        %v2003 = vmul.f32 1.0, %v2002
        %v2004 = vrcp.pop %v1978
        %v2005 = vmul.f32 1.0, %v2004
        %v2006 = vrcp.pop %v1979
        %v2007 = vmul.f32 1.0, %v2006
        %v2008 = vrcp.pop %v1980
        %v2009 = vmul.f32 1.0, %v2008
        %v2010 = vrcp.pop %v1981
        %v2011 = vmul.f32 1.0, %v2010
        %v2012 = vrcp.pop %v1982
        %v2013 = vmul.f32 1.0, %v2012
        %v2014 = vrcp.pop %v1983
        %v2015 = vmul.f32 1.0, %v2014
        %v2016 = vrcp.pop %v1984
        %v2017 = vmul.f32 1.0, %v2016
        %v2018 = vrcp.pop %v1985
        %v2019 = vmul.f32 1.0, %v2018
        %v2020 = vrcp.pop %v1986
        %v2021 = vmul.f32 1.0, %v2020
        %v2022 = vrcp.pop %v1987
        %v2023 = vmul.f32 1.0, %v2022
        %v2024 = vrcp.pop %v1988
        %v2025 = vmul.f32 1.0, %v2024
        %v2026 = vrcp.pop %v1989
        %v2027 = vmul.f32 1.0, %v2026
        %v2028 = vrcp.pop %v1990
        %v2029 = vmul.f32 1.0, %v2028
        %v2030 = vrcp.pop %v1991
        %v2031 = vmul.f32 1.0, %v2030
        %v2032 = vrcp.pop %v1992
        %v2033 = vmul.f32 1.0, %v2032
        %v2034 = vrcp.pop %v1993
        %v2035 = vmul.f32 1.0, %v2034
        %v2036 = vrcp.pop %v1994
        %v2037 = vmul.f32 1.0, %v2036
        %v2038 = vrcp.pop %v1995
        %v2039 = vmul.f32 1.0, %v2038
        %v2040 = vrcp.pop %v1996
        %v2041 = vmul.f32 1.0, %v2040
        %v2042 = vrcp.pop %v1997
        %v2043 = vmul.f32 1.0, %v2042
        %v2044 = vrcp.pop %v1998
        %v2045 = vmul.f32 1.0, %v2044
        %v2046 = vrcp.pop %v1999
        %v2047 = vmul.f32 1.0, %v2046
        %v2048 = vsub.f32 1.0, %v2001
        %v2049 = vsub.f32 1.0, %v2003
        %v2050 = vsub.f32 1.0, %v2005
        %v2051 = vsub.f32 1.0, %v2007
        %v2052 = vsub.f32 1.0, %v2009
        %v2053 = vsub.f32 1.0, %v2011
        %v2054 = vsub.f32 1.0, %v2013
        %v2055 = vsub.f32 1.0, %v2015
        %v2056 = vsub.f32 1.0, %v2017
        %v2057 = vsub.f32 1.0, %v2019
        %v2058 = vsub.f32 1.0, %v2021
        %v2059 = vsub.f32 1.0, %v2023
        %v2060 = vsub.f32 1.0, %v2025
        %v2061 = vsub.f32 1.0, %v2027
        %v2062 = vsub.f32 1.0, %v2029
        %v2063 = vsub.f32 1.0, %v2031
        %v2064 = vsub.f32 1.0, %v2033
        %v2065 = vsub.f32 1.0, %v2035
        %v2066 = vsub.f32 1.0, %v2037
        %v2067 = vsub.f32 1.0, %v2039
        %v2068 = vsub.f32 1.0, %v2041
        %v2069 = vsub.f32 1.0, %v2043
        %v2070 = vsub.f32 1.0, %v2045
        %v2071 = vsub.f32 1.0, %v2047
        %v2072 = vmul.f32 %v2048, %v1880
        %v2073 = vmul.f32 %v2049, %v1881
        %v2074 = vmul.f32 %v2050, %v1882
        %v2075 = vmul.f32 %v2051, %v1883
        %v2076 = vmul.f32 %v2052, %v1884
        %v2077 = vmul.f32 %v2053, %v1885
        %v2078 = vmul.f32 %v2054, %v1886
        %v2079 = vmul.f32 %v2055, %v1887
        %v2080 = vmul.f32 %v2056, %v1888
        %v2081 = vmul.f32 %v2057, %v1889
        %v2082 = vmul.f32 %v2058, %v1890
        %v2083 = vmul.f32 %v2059, %v1891
        %v2084 = vmul.f32 %v2060, %v1892
        %v2085 = vmul.f32 %v2061, %v1893
        %v2086 = vmul.f32 %v2062, %v1894
        %v2087 = vmul.f32 %v2063, %v1895
        %v2088 = vmul.f32 %v2064, %v1896
        %v2089 = vmul.f32 %v2065, %v1897
        %v2090 = vmul.f32 %v2066, %v1898
        %v2091 = vmul.f32 %v2067, %v1899
        %v2092 = vmul.f32 %v2068, %v1900
        %v2093 = vmul.f32 %v2069, %v1901
        %v2094 = vmul.f32 %v2070, %v1902
        %v2095 = vmul.f32 %v2071, %v1903
        %v2096 = vpack.c.bf16 %v2078, %v2072
        %v2097 = vpack.c.bf16 %v2079, %v2073
        %v2098 = vpack.c.bf16 %v2080, %v2074
        %v2099 = vpack.c.bf16 %v2081, %v2075
        %v2100 = vpack.c.bf16 %v2082, %v2076
        %v2101 = vpack.c.bf16 %v2083, %v2077
        %v2102 = vpack.c.bf16 %v2090, %v2084
        %v2103 = vpack.c.bf16 %v2091, %v2085
        %v2104 = vpack.c.bf16 %v2092, %v2086
        %v2105 = vpack.c.bf16 %v2093, %v2087
        %v2106 = vpack.c.bf16 %v2094, %v2088
        %v2107 = vpack.c.bf16 %v2095, %v2089
        %v2120 = vunpack.c.l.b16 %v2096
        %v2121 = vunpack.c.l.b16 %v2097
        %v2122 = vunpack.c.l.b16 %v2098
        %v2123 = vunpack.c.l.b16 %v2099
        %v2124 = vunpack.c.l.b16 %v2100
        %v2125 = vunpack.c.l.b16 %v2101
        %v2126 = vunpack.c.h.b16 %v2096
        %v2127 = vunpack.c.h.b16 %v2097
        %v2128 = vunpack.c.h.b16 %v2098
        %v2129 = vunpack.c.h.b16 %v2099
        %v2130 = vunpack.c.h.b16 %v2100
        %v2131 = vunpack.c.h.b16 %v2101
        %v2132 = vunpack.c.l.b16 %v2102
        %v2133 = vunpack.c.l.b16 %v2103
        %v2134 = vunpack.c.l.b16 %v2104
        %v2135 = vunpack.c.l.b16 %v2105
        %v2136 = vunpack.c.l.b16 %v2106
        %v2137 = vunpack.c.l.b16 %v2107
        %v2138 = vunpack.c.h.b16 %v2102
        %v2139 = vunpack.c.h.b16 %v2103
        %v2140 = vunpack.c.h.b16 %v2104
        %v2141 = vunpack.c.h.b16 %v2105
        %v2142 = vunpack.c.h.b16 %v2106
        %v2143 = vunpack.c.h.b16 %v2107
        %v2144 = vpack.c.b16 %v2121, %v2120
        %v2145 = vpack.c.b16 %v2123, %v2122
        %v2146 = vpack.c.b16 %v2125, %v2124
        %v2147 = vpack.c.b16 %v2127, %v2126
        %v2148 = vpack.c.b16 %v2129, %v2128
        %v2149 = vpack.c.b16 %v2131, %v2130
        %v2150 = vpack.c.b16 %v2133, %v2132
        %v2151 = vpack.c.b16 %v2135, %v2134
        %v2152 = vpack.c.b16 %v2137, %v2136
        %v2153 = vpack.c.b16 %v2139, %v2138
        %v2154 = vpack.c.b16 %v2141, %v2140
        %v2155 = vpack.c.b16 %v2143, %v2142
        %2168 = vst [vmem:[%s340] sm:$0xff] %v2144
        %2169 = vst [vmem:[%s340 + $0x8] sm:$0xff] %v2145
        %2170 = vst [vmem:[%s340 + $0x10] sm:$0xff] %v2146
        %2171 = vst [vmem:[%s340 + $0x18] sm:$0xff] %v2147
        %2172 = vst [vmem:[%s340 + $0x20] sm:$0xff] %v2148
        %2173 = vst [vmem:[%s340 + $0x28] sm:$0xff] %v2149
        %2174 = vst [vmem:[%s340 + $0x30] sm:$0xff] %v2150
        %2175 = vst [vmem:[%s340 + $0x38] sm:$0xff] %v2151
        %2176 = vst [vmem:[%s340 + $0x40] sm:$0xff] %v2152
        %2177 = vst [vmem:[%s340 + $0x48] sm:$0xff] %v2153
        %2178 = vst [vmem:[%s340 + $0x50] sm:$0xff] %v2154
        %2179 = vst [vmem:[%s340 + $0x58] sm:$0xff] %v2155
        %v2180 = vpack.c.bf16 %v2013, %v2001
        %v2181 = vpack.c.bf16 %v2015, %v2003
        %v2182 = vpack.c.bf16 %v2017, %v2005
        %v2183 = vpack.c.bf16 %v2019, %v2007
        %v2184 = vpack.c.bf16 %v2021, %v2009
        %v2185 = vpack.c.bf16 %v2023, %v2011
        %v2186 = vpack.c.bf16 %v2037, %v2025
        %v2187 = vpack.c.bf16 %v2039, %v2027
        %v2188 = vpack.c.bf16 %v2041, %v2029
        %v2189 = vpack.c.bf16 %v2043, %v2031
        %v2190 = vpack.c.bf16 %v2045, %v2033
        %v2191 = vpack.c.bf16 %v2047, %v2035
        %v2204 = vunpack.c.l.b16 %v2180
        %v2205 = vunpack.c.l.b16 %v2181
        %v2206 = vunpack.c.l.b16 %v2182
        %v2207 = vunpack.c.l.b16 %v2183
        %v2208 = vunpack.c.l.b16 %v2184
        %v2209 = vunpack.c.l.b16 %v2185
        %v2210 = vunpack.c.h.b16 %v2180
        %v2211 = vunpack.c.h.b16 %v2181
        %v2212 = vunpack.c.h.b16 %v2182
        %v2213 = vunpack.c.h.b16 %v2183
        %v2214 = vunpack.c.h.b16 %v2184
        %v2215 = vunpack.c.h.b16 %v2185
        %v2216 = vunpack.c.l.b16 %v2186
        %v2217 = vunpack.c.l.b16 %v2187
        %v2218 = vunpack.c.l.b16 %v2188
        %v2219 = vunpack.c.l.b16 %v2189
        %v2220 = vunpack.c.l.b16 %v2190
        %v2221 = vunpack.c.l.b16 %v2191
        %v2222 = vunpack.c.h.b16 %v2186
        %v2223 = vunpack.c.h.b16 %v2187
        %v2224 = vunpack.c.h.b16 %v2188
        %v2225 = vunpack.c.h.b16 %v2189
        %v2226 = vunpack.c.h.b16 %v2190
        %v2227 = vunpack.c.h.b16 %v2191
        %v2228 = vpack.c.b16 %v2205, %v2204
        %v2229 = vpack.c.b16 %v2207, %v2206
        %v2230 = vpack.c.b16 %v2209, %v2208
        %v2231 = vpack.c.b16 %v2211, %v2210
        %v2232 = vpack.c.b16 %v2213, %v2212
        %v2233 = vpack.c.b16 %v2215, %v2214
        %v2234 = vpack.c.b16 %v2217, %v2216
        %v2235 = vpack.c.b16 %v2219, %v2218
        %v2236 = vpack.c.b16 %v2221, %v2220
        %v2237 = vpack.c.b16 %v2223, %v2222
        %v2238 = vpack.c.b16 %v2225, %v2224
        %v2239 = vpack.c.b16 %v2227, %v2226
        %2252 = vst [vmem:[%s340 + $0x60] sm:$0xff] %v2228
        %2253 = vst [vmem:[%s340 + $0x68] sm:$0xff] %v2229
        %2254 = vst [vmem:[%s340 + $0x70] sm:$0xff] %v2230
        %2255 = vst [vmem:[%s340 + $0x78] sm:$0xff] %v2231
        %2256 = vst [vmem:[%s340 + $0x80] sm:$0xff] %v2232
        %2257 = vst [vmem:[%s340 + $0x88] sm:$0xff] %v2233
        %2258 = vst [vmem:[%s340 + $0x90] sm:$0xff] %v2234
        %2259 = vst [vmem:[%s340 + $0x98] sm:$0xff] %v2235
        %2260 = vst [vmem:[%s340 + $0xa0] sm:$0xff] %v2236
        %2261 = vst [vmem:[%s340 + $0xa8] sm:$0xff] %v2237
        %2262 = vst [vmem:[%s340 + $0xb0] sm:$0xff] %v2238
        %2263 = vst [vmem:[%s340 + $0xb8] sm:$0xff] %v2239
        %s2264 = sand.u32 %s158, 1
        %s2265 = scalar_lea.sflag [#allocation4], %s2264
        %s2266 = sand.u32 %s158, 1
        %s2267 = smul.addr %s2266, 192
        %s2268 = scalar_lea.vmem [#allocation10], %s2267
        // Predicated region
        $region57: #{tpu_custom_call.1} parent=39 // pred_check
          %p2269 = pneg %p168
        $region58: #{tpu_custom_call.1} parent=39 // pred_check_branch
          %2271 = sbr.rel (%p2269) target = $region60
        $region59: #{tpu_custom_call.1} parent=39 // pred_region
          %s2273 = ssub.s32 3072, 3072
          %2274 = vsyncadd %s2265, %s2273
          %s2275 = smul.addr %s26, 48
          %s2276 = smul.addr %s2275, 64
          %s2277 = scalar_lea.hbm %s5, %s2276
          %s2278 = sshll.u32 %s2268, 4
          %s2279 = int_to_ptr.vmem [resolvable:$true] %s2278
          %2284 = dma.vmem_to_hbm [thread:$0]  %s2279, 3072, %s2277, %s2265, 384, 384, 24
        $region60: #{tpu_custom_call.1} parent=39 // pred_fallthru
          _
      $region40: #{tpu_custom_call.1} parent=5 // pred_fallthru
        _
      %p2285 = scmp.le.s32.totalorder 2, %s21
      // Predicated region
      $region61: #{tpu_custom_call.1} parent=5 // pred_check
        %p2286 = pneg %p2285
      $region62: #{tpu_custom_call.1} parent=5 // pred_check_branch
        %2288 = sbr.rel (%p2286) target = $region64
      $region63: #{tpu_custom_call.1} parent=5 // pred_region
        %s2289 = ssub.s32 %s21, 2
        // Predicated region
        $region65: #{tpu_custom_call.1} parent=63 // pred_check
          %p2290 = pneg %p174
        $region66: #{tpu_custom_call.1} parent=63 // pred_check_branch
          %2292 = sbr.rel (%p2290) target = $region68
        $region67: #{tpu_custom_call.1} parent=63 // pred_region
          %s2293 = sand.u32 %s159, 1
          %s2294 = scalar_lea.sflag [#allocation4], %s2293
          %s2295 = sand.u32 %s159, 1
          %s2296 = smul.addr %s2295, 192
          %s2297 = scalar_lea.vmem [#allocation10], %s2296
          %2298 = dma.done %s2294, 3072
        $region68: #{tpu_custom_call.1} parent=63 // pred_fallthru
          _
      $region64: #{tpu_custom_call.1} parent=5 // pred_fallthru
        _
    $region6: #{tpu_custom_call.1} parent=1 // loop_footer
      %s25 = sadd.s32 1, %s21
    $region7: #{tpu_custom_call.1} parent=1 // loop_footer_branch
      %20 = sbr.rel target = $region3
    $region8: #{tpu_custom_call.1} parent=1 // loop_exit
      _
    %2299 = vsyncpa [#allocation3], 1
    %s2300 = scalar_lea.sflag [#allocation3], 1
    %2301 = vsyncpa %s2300, 1
    %2302 = vsyncpa [#allocation6], 1
    %s2303 = scalar_lea.sflag [#allocation6], 1
    %2304 = vsyncpa %s2303, 1
    %2305 = vsyncpa [#allocation9], 1
    %2306 = vsyncpa [#allocation4], 1
    %s2307 = scalar_lea.sflag [#allocation4], 1
    %2308 = vsyncpa %s2307, 1

</llo_original>
